<compile_context>
chip_gen: v7x
topology: tpu7x:2x2x1
jax: 0.10.0
libtpu: 0.0.40
codegen_flags: <defaults>
</compile_context>

<pallas_src>
import functools

import jax
import jax.numpy as jnp
from jax.experimental import pallas as pl
from jax.experimental.pallas import tpu as pltpu

HIDDEN_LAYERS = [128, 96, 64, 48, 32]


def _round_up(n, m):
    return ((n + m - 1) // m) * m


def mlp_kernel(x_ref, *refs, matmul_dtype, ew_dtype):
    """Whole-MLP forward for one batch tile (batch on the lane axis).

    refs = (w0, b0, w1, b1, ..., wL, bL, o_ref)
      w0:      (H0, 1)       first-layer weight column (ew_dtype)
      wi:      (out, in)     hidden-layer weights (matmul_dtype, host-pre-cast)
      wL:      (H_last, 1)   last-layer weight, pre-transposed column (ew_dtype)
      bi:      (out, 1)      biases as columns (ew_dtype; last bias (1,1) f32)
      x_ref:   (1, batch_tile)
      o_ref:   (1, batch_tile)
    """
    o_ref = refs[-1]
    param_refs = refs[:-1]
    n_layers = len(param_refs) // 2

    x = x_ref[...].astype(ew_dtype)                    # (1, Bt), batch on lanes

    # Layer 0: contraction dim == 1 -> outer product on the VPU (no MXU pass).
    w0 = param_refs[0][...]                            # (H0, 1), ew_dtype
    b0 = param_refs[1][...]                            # (H0, 1), ew_dtype
    h = jnp.maximum(w0 * x + b0, 0.0)                  # (H0, Bt)
    # dropout(eval) == identity

    # Hidden layers 1..L-2: MXU matmuls W (out, in) @ h (in, Bt); f32 accumulate.
    for li in range(1, n_layers - 1):
        w = param_refs[2 * li][...]                    # already matmul_dtype
        b = param_refs[2 * li + 1][...]                # (out, 1), ew_dtype
        acc = jnp.dot(w, h.astype(matmul_dtype),
                      preferred_element_type=jnp.float32)
        h = jnp.maximum(acc.astype(ew_dtype) + b, 0.0)  # bias + ReLU in ew_dtype
        # dropout(eval) == identity

    # Last layer: out_features == 1 -> elementwise multiply + f32 sublane reduce.
    wl = param_refs[-2][...]                           # (H_last, 1), ew_dtype
    bl = param_refs[-1][...].astype(jnp.float32)       # (1, 1)
    prod = (wl * h).astype(jnp.float32)
    out = jnp.sum(prod, axis=0, keepdims=True) + bl    # (1, Bt)
    o_ref[...] = out.astype(o_ref.dtype)


def init_params(key, hidden_layers=HIDDEN_LAYERS, dtype=jnp.float32):
    """PyTorch nn.Linear default init (U[-1/sqrt(fan_in), +1/sqrt(fan_in)]).

    Weights in PyTorch layout (out_features, in_features); biases (out_features,).
    """
    dims = [1] + list(hidden_layers) + [1]
    params = []
    for i in range(len(dims) - 1):
        fan_in, fan_out = dims[i], dims[i + 1]
        key, kw, kb = jax.random.split(key, 3)
        bound = 1.0 / (fan_in ** 0.5)
        w = jax.random.uniform(kw, (fan_out, fan_in), dtype, -bound, bound)
        b = jax.random.uniform(kb, (fan_out,), dtype, -bound, bound)
        params.append((w, b))
    return params


@functools.partial(jax.jit,
                   static_argnames=("batch_tile", "matmul_dtype", "elementwise_dtype"))
def mlp_forward(x, params, batch_tile=2048, matmul_dtype=jnp.bfloat16,
                elementwise_dtype=jnp.float32):
    """x: (B, 1) float32 batch of scalar time points. Returns (B, 1) float32.

    batch_tile: lane-aligned tile (default 2048; clamped to the padded batch).
    matmul_dtype: MXU operand dtype (bf16 recommended on v5e/v6e/v7x).
    elementwise_dtype: VPU math dtype (f32 everywhere / v5e; bf16 on v6e/v7x).
    """
    B = x.shape[0]
    n_layers = len(params)

    # Lane-aligned tile, clamped so small batches still produce a valid grid.
    bt = max(128, min(_round_up(batch_tile, 128), _round_up(B, 128)))
    Bp = _round_up(B, bt)

    x_lanes = x.reshape(1, B).astype(jnp.float32)      # batch -> lane axis
    if Bp != B:
        x_lanes = jnp.pad(x_lanes, ((0, 0), (0, Bp - B)))

    # x / out are tiled over the batch (lanes); all parameters are passed
    # full-size (block_shape == full array shape, constant index -> single DMA).
    in_specs = [pl.BlockSpec((1, bt), lambda i: (0, i))]
    flat_args = [x_lanes]
    for li, (w, b) in enumerate(params):
        out_f, in_f = w.shape
        if li == 0:
            w_k = w.reshape(out_f, 1).astype(elementwise_dtype)   # column for VPU outer product
            b_k = b.reshape(out_f, 1).astype(elementwise_dtype)
        elif li == n_layers - 1:
            w_k = w.T.reshape(in_f, 1).astype(elementwise_dtype)  # column for mul + reduce
            b_k = b.reshape(1, 1).astype(jnp.float32)
        else:
            w_k = w.astype(matmul_dtype)                          # host pre-cast for MXU
            b_k = b.reshape(out_f, 1).astype(elementwise_dtype)
        in_specs.append(pl.BlockSpec(w_k.shape, lambda i: (0, 0)))
        in_specs.append(pl.BlockSpec(b_k.shape, lambda i: (0, 0)))
        flat_args.append(w_k)
        flat_args.append(b_k)

    kernel = functools.partial(mlp_kernel, matmul_dtype=matmul_dtype,
                               ew_dtype=elementwise_dtype)
    out_lanes = pl.pallas_call(
        kernel,
        out_shape=jax.ShapeDtypeStruct((1, Bp), x.dtype),
        grid=(Bp // bt,),
        in_specs=in_specs,
        out_specs=pl.BlockSpec((1, bt), lambda i: (0, i)),
        compiler_params=pltpu.CompilerParams(
            dimension_semantics=("parallel",)),  # shards grid steps across TCs (v7x)
    )(*flat_args)
    return out_lanes[:, :B].reshape(B, 1)


def mlp_reference(x, params):
    """Pure-JAX f32 reference (standard (batch, features) layout)."""
    h = x
    for li, (w, b) in enumerate(params):
        h = jnp.dot(h, w.T, precision=jax.lax.Precision.HIGHEST) + b
        if li < len(params) - 1:
            h = jnp.maximum(h, 0.0)
    return h


if __name__ == "__main__":
    key = jax.random.PRNGKey(0)
    key_p, key_x = jax.random.split(key)

    params = init_params(key_p)

    # Small batch of scalar time points (B, 1).
    B = 512
    x = jax.random.uniform(key_x, (B, 1), jnp.float32, -1.0, 1.0)
    ref = mlp_reference(x, params)

    # (a) Exactness check: f32 MXU path, tile clamps to the whole batch.
    out_f32 = mlp_forward(x, params, matmul_dtype=jnp.float32,
                          elementwise_dtype=jnp.float32)
    out_f32 = jax.block_until_ready(out_f32)
    assert out_f32.shape == (B, 1) and out_f32.dtype == jnp.float32
    assert jnp.allclose(out_f32, ref, atol=1e-4, rtol=1e-4), "f32 mismatch vs reference"

    # (b) Recommended fast config for v6e/v7x: bf16 MXU operands (host-pre-cast
    #     weights) + packed-bf16 elementwise, 2-step parallel grid (both TCs).
    #     Checked against the f32 reference at bf16-appropriate tolerance.
    out_bf16 = mlp_forward(x, params, batch_tile=256,
                           matmul_dtype=jnp.bfloat16,
                           elementwise_dtype=jnp.bfloat16)
    out_bf16 = jax.block_until_ready(out_bf16)
    assert out_bf16.shape == (B, 1) and out_bf16.dtype == jnp.float32
    assert jnp.allclose(out_bf16, ref, atol=5e-2, rtol=5e-2), "bf16 mismatch vs reference"

    print("KERNEL_OK")
</pallas_src>

<mosaic_0001>
module attributes {stable_mosaic.version = 11 : i64} {
  func.func @mlp_kernel(%arg0: i32, %arg1: memref<1x512xf32, #tpu.memory_space<vmem>>, %arg2: memref<128x1xf32, #tpu.memory_space<vmem>>, %arg3: memref<128x1xf32, #tpu.memory_space<vmem>>, %arg4: memref<96x128xf32, #tpu.memory_space<vmem>>, %arg5: memref<96x1xf32, #tpu.memory_space<vmem>>, %arg6: memref<64x96xf32, #tpu.memory_space<vmem>>, %arg7: memref<64x1xf32, #tpu.memory_space<vmem>>, %arg8: memref<48x64xf32, #tpu.memory_space<vmem>>, %arg9: memref<48x1xf32, #tpu.memory_space<vmem>>, %arg10: memref<32x48xf32, #tpu.memory_space<vmem>>, %arg11: memref<32x1xf32, #tpu.memory_space<vmem>>, %arg12: memref<32x1xf32, #tpu.memory_space<vmem>>, %arg13: memref<1x1xf32, #tpu.memory_space<vmem>>, %arg14: memref<1x512xf32, #tpu.memory_space<vmem>>) attributes {dimension_semantics = [#tpu.dimension_semantics<parallel>], iteration_bounds = array<i64: 1>, scalar_prefetch = 0 : i64, scratch_operands = 0 : i64, tpu.core_type = #tpu.core_type<tc>, window_params = [{transform_indices = @transform_0, window_bounds = array<i64: 1, 512>}, {pipeline_mode = #tpu.pipeline_mode<synchronous>, transform_indices = @transform_1, window_bounds = array<i64: 128, 1>}, {pipeline_mode = #tpu.pipeline_mode<synchronous>, transform_indices = @transform_2, window_bounds = array<i64: 128, 1>}, {pipeline_mode = #tpu.pipeline_mode<synchronous>, transform_indices = @transform_3, window_bounds = array<i64: 96, 128>}, {pipeline_mode = #tpu.pipeline_mode<synchronous>, transform_indices = @transform_4, window_bounds = array<i64: 96, 1>}, {pipeline_mode = #tpu.pipeline_mode<synchronous>, transform_indices = @transform_5, window_bounds = array<i64: 64, 96>}, {pipeline_mode = #tpu.pipeline_mode<synchronous>, transform_indices = @transform_6, window_bounds = array<i64: 64, 1>}, {pipeline_mode = #tpu.pipeline_mode<synchronous>, transform_indices = @transform_7, window_bounds = array<i64: 48, 64>}, {pipeline_mode = #tpu.pipeline_mode<synchronous>, transform_indices = @transform_8, window_bounds = array<i64: 48, 1>}, {pipeline_mode = #tpu.pipeline_mode<synchronous>, transform_indices = @transform_9, window_bounds = array<i64: 32, 48>}, {pipeline_mode = #tpu.pipeline_mode<synchronous>, transform_indices = @transform_10, window_bounds = array<i64: 32, 1>}, {pipeline_mode = #tpu.pipeline_mode<synchronous>, transform_indices = @transform_11, window_bounds = array<i64: 32, 1>}, {pipeline_mode = #tpu.pipeline_mode<synchronous>, transform_indices = @transform_12, window_bounds = array<i64: 1, 1>}, {transform_indices = @transform_13, window_bounds = array<i64: 1, 512>}]} {
    %c0 = arith.constant 0 : index
    %c0_0 = arith.constant 0 : index
    %0 = vector.load %arg1[%c0, %c0_0] : memref<1x512xf32, #tpu.memory_space<vmem>>, vector<1x512xf32>
    %c0_1 = arith.constant 0 : index
    %c0_2 = arith.constant 0 : index
    %1 = vector.load %arg2[%c0_1, %c0_2] : memref<128x1xf32, #tpu.memory_space<vmem>>, vector<128x1xf32>
    %c0_3 = arith.constant 0 : index
    %c0_4 = arith.constant 0 : index
    %2 = vector.load %arg3[%c0_3, %c0_4] : memref<128x1xf32, #tpu.memory_space<vmem>>, vector<128x1xf32>
    %3 = vector.broadcast %1 : vector<128x1xf32> to vector<128x512xf32>
    %4 = vector.broadcast %0 : vector<1x512xf32> to vector<128x512xf32>
    %5 = arith.mulf %3, %4 : vector<128x512xf32>
    %6 = vector.broadcast %2 : vector<128x1xf32> to vector<128x512xf32>
    %7 = arith.addf %5, %6 : vector<128x512xf32>
    %cst = arith.constant 0.000000e+00 : f32
    %8 = vector.broadcast %cst : f32 to vector<128x512xf32>
    %9 = arith.maximumf %7, %8 : vector<128x512xf32>
    %c0_5 = arith.constant 0 : index
    %c0_6 = arith.constant 0 : index
    %10 = vector.load %arg4[%c0_5, %c0_6] : memref<96x128xf32, #tpu.memory_space<vmem>>, vector<96x128xf32>
    %c0_7 = arith.constant 0 : index
    %c0_8 = arith.constant 0 : index
    %11 = vector.load %arg5[%c0_7, %c0_8] : memref<96x1xf32, #tpu.memory_space<vmem>>, vector<96x1xf32>
    %cst_9 = arith.constant dense<0.000000e+00> : vector<96x512xf32>
    %12 = tpu.matmul %10, %9, %cst_9 {dimension_numbers = #tpu.dot_dimension_numbers<[1], [0], [0], [1], [0, 0, 1, 1], [], []>} : vector<96x128xf32>, vector<128x512xf32>, vector<96x512xf32> -> vector<96x512xf32>
    %13 = vector.broadcast %11 : vector<96x1xf32> to vector<96x512xf32>
    %14 = arith.addf %12, %13 : vector<96x512xf32>
    %cst_10 = arith.constant 0.000000e+00 : f32
    %15 = vector.broadcast %cst_10 : f32 to vector<96x512xf32>
    %16 = arith.maximumf %14, %15 : vector<96x512xf32>
    %c0_11 = arith.constant 0 : index
    %c0_12 = arith.constant 0 : index
    %17 = vector.load %arg6[%c0_11, %c0_12] : memref<64x96xf32, #tpu.memory_space<vmem>>, vector<64x96xf32>
    %c0_13 = arith.constant 0 : index
    %c0_14 = arith.constant 0 : index
    %18 = vector.load %arg7[%c0_13, %c0_14] : memref<64x1xf32, #tpu.memory_space<vmem>>, vector<64x1xf32>
    %cst_15 = arith.constant dense<0.000000e+00> : vector<64x512xf32>
    %19 = tpu.matmul %17, %16, %cst_15 {dimension_numbers = #tpu.dot_dimension_numbers<[1], [0], [0], [1], [0, 0, 1, 1], [], []>} : vector<64x96xf32>, vector<96x512xf32>, vector<64x512xf32> -> vector<64x512xf32>
    %20 = vector.broadcast %18 : vector<64x1xf32> to vector<64x512xf32>
    %21 = arith.addf %19, %20 : vector<64x512xf32>
    %cst_16 = arith.constant 0.000000e+00 : f32
    %22 = vector.broadcast %cst_16 : f32 to vector<64x512xf32>
    %23 = arith.maximumf %21, %22 : vector<64x512xf32>
    %c0_17 = arith.constant 0 : index
    %c0_18 = arith.constant 0 : index
    %24 = vector.load %arg8[%c0_17, %c0_18] : memref<48x64xf32, #tpu.memory_space<vmem>>, vector<48x64xf32>
    %c0_19 = arith.constant 0 : index
    %c0_20 = arith.constant 0 : index
    %25 = vector.load %arg9[%c0_19, %c0_20] : memref<48x1xf32, #tpu.memory_space<vmem>>, vector<48x1xf32>
    %cst_21 = arith.constant dense<0.000000e+00> : vector<48x512xf32>
    %26 = tpu.matmul %24, %23, %cst_21 {dimension_numbers = #tpu.dot_dimension_numbers<[1], [0], [0], [1], [0, 0, 1, 1], [], []>} : vector<48x64xf32>, vector<64x512xf32>, vector<48x512xf32> -> vector<48x512xf32>
    %27 = vector.broadcast %25 : vector<48x1xf32> to vector<48x512xf32>
    %28 = arith.addf %26, %27 : vector<48x512xf32>
    %cst_22 = arith.constant 0.000000e+00 : f32
    %29 = vector.broadcast %cst_22 : f32 to vector<48x512xf32>
    %30 = arith.maximumf %28, %29 : vector<48x512xf32>
    %c0_23 = arith.constant 0 : index
    %c0_24 = arith.constant 0 : index
    %31 = vector.load %arg10[%c0_23, %c0_24] : memref<32x48xf32, #tpu.memory_space<vmem>>, vector<32x48xf32>
    %c0_25 = arith.constant 0 : index
    %c0_26 = arith.constant 0 : index
    %32 = vector.load %arg11[%c0_25, %c0_26] : memref<32x1xf32, #tpu.memory_space<vmem>>, vector<32x1xf32>
    %cst_27 = arith.constant dense<0.000000e+00> : vector<32x512xf32>
    %33 = tpu.matmul %31, %30, %cst_27 {dimension_numbers = #tpu.dot_dimension_numbers<[1], [0], [0], [1], [0, 0, 1, 1], [], []>} : vector<32x48xf32>, vector<48x512xf32>, vector<32x512xf32> -> vector<32x512xf32>
    %34 = vector.broadcast %32 : vector<32x1xf32> to vector<32x512xf32>
    %35 = arith.addf %33, %34 : vector<32x512xf32>
    %cst_28 = arith.constant 0.000000e+00 : f32
    %36 = vector.broadcast %cst_28 : f32 to vector<32x512xf32>
    %37 = arith.maximumf %35, %36 : vector<32x512xf32>
    %c0_29 = arith.constant 0 : index
    %c0_30 = arith.constant 0 : index
    %38 = vector.load %arg12[%c0_29, %c0_30] : memref<32x1xf32, #tpu.memory_space<vmem>>, vector<32x1xf32>
    %c0_31 = arith.constant 0 : index
    %c0_32 = arith.constant 0 : index
    %39 = vector.load %arg13[%c0_31, %c0_32] : memref<1x1xf32, #tpu.memory_space<vmem>>, vector<1x1xf32>
    %40 = vector.broadcast %38 : vector<32x1xf32> to vector<32x512xf32>
    %41 = arith.mulf %40, %37 : vector<32x512xf32>
    %cst_33 = arith.constant dense<0.000000e+00> : vector<512xf32>
    %42 = vector.multi_reduction <add>, %41, %cst_33 [0] : vector<32x512xf32> to vector<512xf32>
    %43 = vector.shape_cast %42 : vector<512xf32> to vector<1x512xf32>
    %44 = vector.broadcast %39 : vector<1x1xf32> to vector<1x512xf32>
    %45 = arith.addf %43, %44 : vector<1x512xf32>
    %c0_34 = arith.constant 0 : index
    %c0_35 = arith.constant 0 : index
    %46 = vector.load %arg14[%c0_34, %c0_35] : memref<1x512xf32, #tpu.memory_space<vmem>>, vector<1x512xf32>
    tpu.vector_store %arg14[%c0_34, %c0_35], %45 {strides = array<i32>} : memref<1x512xf32, #tpu.memory_space<vmem>>, vector<1x512xf32>,
    return
  }
  func.func @transform_0(%arg0: i32) -> (i32, i32) {
    %c0_i32 = arith.constant 0 : i32
    %c0_i32_0 = arith.constant 0 : i32
    return %c0_i32, %arg0 : i32, i32
  }
  func.func @transform_1(%arg0: i32) -> (i32, i32) {
    %c0_i32 = arith.constant 0 : i32
    %c0_i32_0 = arith.constant 0 : i32
    %c0_i32_1 = arith.constant 0 : i32
    return %c0_i32, %c0_i32_0 : i32, i32
  }
  func.func @transform_2(%arg0: i32) -> (i32, i32) {
    %c0_i32 = arith.constant 0 : i32
    %c0_i32_0 = arith.constant 0 : i32
    %c0_i32_1 = arith.constant 0 : i32
    return %c0_i32, %c0_i32_0 : i32, i32
  }
  func.func @transform_3(%arg0: i32) -> (i32, i32) {
    %c0_i32 = arith.constant 0 : i32
    %c0_i32_0 = arith.constant 0 : i32
    %c0_i32_1 = arith.constant 0 : i32
    return %c0_i32, %c0_i32_0 : i32, i32
  }
  func.func @transform_4(%arg0: i32) -> (i32, i32) {
    %c0_i32 = arith.constant 0 : i32
    %c0_i32_0 = arith.constant 0 : i32
    %c0_i32_1 = arith.constant 0 : i32
    return %c0_i32, %c0_i32_0 : i32, i32
  }
  func.func @transform_5(%arg0: i32) -> (i32, i32) {
    %c0_i32 = arith.constant 0 : i32
    %c0_i32_0 = arith.constant 0 : i32
    %c0_i32_1 = arith.constant 0 : i32
    return %c0_i32, %c0_i32_0 : i32, i32
  }
  func.func @transform_6(%arg0: i32) -> (i32, i32) {
    %c0_i32 = arith.constant 0 : i32
    %c0_i32_0 = arith.constant 0 : i32
    %c0_i32_1 = arith.constant 0 : i32
    return %c0_i32, %c0_i32_0 : i32, i32
  }
  func.func @transform_7(%arg0: i32) -> (i32, i32) {
    %c0_i32 = arith.constant 0 : i32
    %c0_i32_0 = arith.constant 0 : i32
    %c0_i32_1 = arith.constant 0 : i32
    return %c0_i32, %c0_i32_0 : i32, i32
  }
  func.func @transform_8(%arg0: i32) -> (i32, i32) {
    %c0_i32 = arith.constant 0 : i32
    %c0_i32_0 = arith.constant 0 : i32
    %c0_i32_1 = arith.constant 0 : i32
    return %c0_i32, %c0_i32_0 : i32, i32
  }
  func.func @transform_9(%arg0: i32) -> (i32, i32) {
    %c0_i32 = arith.constant 0 : i32
    %c0_i32_0 = arith.constant 0 : i32
    %c0_i32_1 = arith.constant 0 : i32
    return %c0_i32, %c0_i32_0 : i32, i32
  }
  func.func @transform_10(%arg0: i32) -> (i32, i32) {
    %c0_i32 = arith.constant 0 : i32
    %c0_i32_0 = arith.constant 0 : i32
    %c0_i32_1 = arith.constant 0 : i32
    return %c0_i32, %c0_i32_0 : i32, i32
  }
  func.func @transform_11(%arg0: i32) -> (i32, i32) {
    %c0_i32 = arith.constant 0 : i32
    %c0_i32_0 = arith.constant 0 : i32
    %c0_i32_1 = arith.constant 0 : i32
    return %c0_i32, %c0_i32_0 : i32, i32
  }
  func.func @transform_12(%arg0: i32) -> (i32, i32) {
    %c0_i32 = arith.constant 0 : i32
    %c0_i32_0 = arith.constant 0 : i32
    %c0_i32_1 = arith.constant 0 : i32
    return %c0_i32, %c0_i32_0 : i32, i32
  }
  func.func @transform_13(%arg0: i32) -> (i32, i32) {
    %c0_i32 = arith.constant 0 : i32
    %c0_i32_0 = arith.constant 0 : i32
    return %c0_i32, %arg0 : i32, i32
  }
}

</mosaic_0001>

<llo_original>
// kernel: mlp_forward.1
$region0: #{mlp_forward.1}
  #allocation0 [shape = 'u32[]', space=smem, size = 0x4, offset = 0x4, fixed_abs, tag = 'smem constant byte address 0x4 - core index']
  #allocation1 [shape = 'u32[144,128]{1,0:T(1,128)}', space=vmem, size = 0x12000, scoped, tag = 'internal scratch']
  #allocation2 [shape = 'f32[1,1]{1,0:T(1,128)S(1)}', space=vmem, size = 0x200, scoped, tag = 'scoped memory for mlp_forward.1']
  %s0 = inlined_call_operand.vmem [shape: f32[1,512], index: 0, kind: input, shape index: {}]
  %s1 = inlined_call_operand.vmem [shape: f32[128,1], index: 1, kind: input, shape index: {}]
  %s2 = inlined_call_operand.vmem [shape: f32[128,1], index: 2, kind: input, shape index: {}]
  %s3 = inlined_call_operand.vmem [shape: f32[96,128], index: 3, kind: input, shape index: {}]
  %s4 = inlined_call_operand.vmem [shape: f32[96,1], index: 4, kind: input, shape index: {}]
  %s5 = inlined_call_operand.vmem [shape: f32[64,96], index: 5, kind: input, shape index: {}]
  %s6 = inlined_call_operand.vmem [shape: f32[64,1], index: 6, kind: input, shape index: {}]
  %s7 = inlined_call_operand.vmem [shape: f32[48,64], index: 7, kind: input, shape index: {}]
  %s8 = inlined_call_operand.vmem [shape: f32[48,1], index: 8, kind: input, shape index: {}]
  %s9 = inlined_call_operand.vmem [shape: f32[32,48], index: 9, kind: input, shape index: {}]
  %s10 = inlined_call_operand.vmem [shape: f32[32,1], index: 10, kind: input, shape index: {}]
  %s11 = inlined_call_operand.vmem [shape: f32[32,1], index: 11, kind: input, shape index: {}]
  %s12 = inlined_call_operand.<no memory space> [shape: f32[1,1], index: 12, kind: input, shape index: {}]
  %s13 = inlined_call_operand.hbm [shape: f32[1,512], index: 13, kind: output, shape index: {}]
  %s14 = sld [smem:[#allocation0]]
  $region62: #{mlp_forward.1} parent=0
    _
  %s16 = ssub.s32 1, %s14
  %s17 = scalar_select 0, %s16, %s14
  %v18 = vstv %s12
  %19 = vst [vmem:[#allocation2] sm:$0x1] %v18
  $region1: #{mlp_forward.1} parent=0
    #allocation3 [shape = 'u8[2048]{0}', space=vmem, size = 0x800, scoped, tag = 'output window, operand 0, single buffered']
    #allocation4 [shape = 's32[1]{0}', space=sflag, size = 0x4, scoped, tag = 'scoped memory for mlp_forward.1']
    %20 = vsyncpa [#allocation4], 0
    // Predicated region
    $region2: #{mlp_forward.1} parent=1 // pred_check
      _
    $region3: #{mlp_forward.1} parent=1 // pred_check_branch
      %22 = sbr.rel (0) target = $region5
    $region4: #{mlp_forward.1} parent=1 // pred_region
      _
    $region5: #{mlp_forward.1} parent=1 // pred_fallthru
      _
    // Predicated region
    $region6: #{mlp_forward.1} parent=1 // pred_check
      _
    $region7: #{mlp_forward.1} parent=1 // pred_check_branch
      %24 = sbr.rel (0) target = $region9
    $region8: #{mlp_forward.1} parent=1 // pred_region
      _
    $region9: #{mlp_forward.1} parent=1 // pred_fallthru
      _
    // Predicated region
    $region10: #{mlp_forward.1} parent=1 // pred_check
      _
    $region11: #{mlp_forward.1} parent=1 // pred_check_branch
      %26 = sbr.rel (0) target = $region13
    $region12: #{mlp_forward.1} parent=1 // pred_region
      _
    $region13: #{mlp_forward.1} parent=1 // pred_fallthru
      _
    // Predicated region
    $region14: #{mlp_forward.1} parent=1 // pred_check
      _
    $region15: #{mlp_forward.1} parent=1 // pred_check_branch
      %28 = sbr.rel (0) target = $region17
    $region16: #{mlp_forward.1} parent=1 // pred_region
      _
    $region17: #{mlp_forward.1} parent=1 // pred_fallthru
      _
    // Predicated region
    $region18: #{mlp_forward.1} parent=1 // pred_check
      _
    $region19: #{mlp_forward.1} parent=1 // pred_check_branch
      %30 = sbr.rel (0) target = $region21
    $region20: #{mlp_forward.1} parent=1 // pred_region
      _
    $region21: #{mlp_forward.1} parent=1 // pred_fallthru
      _
    // Predicated region
    $region22: #{mlp_forward.1} parent=1 // pred_check
      _
    $region23: #{mlp_forward.1} parent=1 // pred_check_branch
      %32 = sbr.rel (0) target = $region25
    $region24: #{mlp_forward.1} parent=1 // pred_region
      _
    $region25: #{mlp_forward.1} parent=1 // pred_fallthru
      _
    // Predicated region
    $region26: #{mlp_forward.1} parent=1 // pred_check
      _
    $region27: #{mlp_forward.1} parent=1 // pred_check_branch
      %34 = sbr.rel (0) target = $region29
    $region28: #{mlp_forward.1} parent=1 // pred_region
      _
    $region29: #{mlp_forward.1} parent=1 // pred_fallthru
      _
    // Predicated region
    $region30: #{mlp_forward.1} parent=1 // pred_check
      _
    $region31: #{mlp_forward.1} parent=1 // pred_check_branch
      %36 = sbr.rel (0) target = $region33
    $region32: #{mlp_forward.1} parent=1 // pred_region
      _
    $region33: #{mlp_forward.1} parent=1 // pred_fallthru
      _
    // Predicated region
    $region34: #{mlp_forward.1} parent=1 // pred_check
      _
    $region35: #{mlp_forward.1} parent=1 // pred_check_branch
      %38 = sbr.rel (0) target = $region37
    $region36: #{mlp_forward.1} parent=1 // pred_region
      _
    $region37: #{mlp_forward.1} parent=1 // pred_fallthru
      _
    // Predicated region
    $region38: #{mlp_forward.1} parent=1 // pred_check
      _
    $region39: #{mlp_forward.1} parent=1 // pred_check_branch
      %40 = sbr.rel (0) target = $region41
    $region40: #{mlp_forward.1} parent=1 // pred_region
      _
    $region41: #{mlp_forward.1} parent=1 // pred_fallthru
      _
    // Predicated region
    $region42: #{mlp_forward.1} parent=1 // pred_check
      _
    $region43: #{mlp_forward.1} parent=1 // pred_check_branch
      %42 = sbr.rel (0) target = $region45
    $region44: #{mlp_forward.1} parent=1 // pred_region
      _
    $region45: #{mlp_forward.1} parent=1 // pred_fallthru
      _
    // Predicated region
    $region46: #{mlp_forward.1} parent=1 // pred_check
      _
    $region47: #{mlp_forward.1} parent=1 // pred_check_branch
      %44 = sbr.rel (0) target = $region49
    $region48: #{mlp_forward.1} parent=1 // pred_region
      _
    $region49: #{mlp_forward.1} parent=1 // pred_fallthru
      _
    // Predicated region
    $region50: #{mlp_forward.1} parent=1 // pred_check
      _
    $region51: #{mlp_forward.1} parent=1 // pred_check_branch
      %46 = sbr.rel (0) target = $region53
    $region52: #{mlp_forward.1} parent=1 // pred_region
      _
    $region53: #{mlp_forward.1} parent=1 // pred_fallthru
      _
    %v47 = vld [vmem:[%s0] sm:$0xf]
    %v48 = vld [vmem:[%s1] sm:$0xff]
    %v49 = vld [vmem:[%s1 + $0x8] sm:$0xff]
    %v50 = vld [vmem:[%s1 + $0x10] sm:$0xff]
    %v51 = vld [vmem:[%s1 + $0x18] sm:$0xff]
    %v52 = vld [vmem:[%s1 + $0x20] sm:$0xff]
    %v53 = vld [vmem:[%s1 + $0x28] sm:$0xff]
    %v54 = vld [vmem:[%s1 + $0x30] sm:$0xff]
    %v55 = vld [vmem:[%s1 + $0x38] sm:$0xff]
    %v56 = vld [vmem:[%s1 + $0x40] sm:$0xff]
    %v57 = vld [vmem:[%s1 + $0x48] sm:$0xff]
    %v58 = vld [vmem:[%s1 + $0x50] sm:$0xff]
    %v59 = vld [vmem:[%s1 + $0x58] sm:$0xff]
    %v60 = vld [vmem:[%s1 + $0x60] sm:$0xff]
    %v61 = vld [vmem:[%s1 + $0x68] sm:$0xff]
    %v62 = vld [vmem:[%s1 + $0x70] sm:$0xff]
    %v63 = vld [vmem:[%s1 + $0x78] sm:$0xff]
    %v64 = vld [vmem:[%s2] sm:$0xff]
    %v65 = vld [vmem:[%s2 + $0x8] sm:$0xff]
    %v66 = vld [vmem:[%s2 + $0x10] sm:$0xff]
    %v67 = vld [vmem:[%s2 + $0x18] sm:$0xff]
    %v68 = vld [vmem:[%s2 + $0x20] sm:$0xff]
    %v69 = vld [vmem:[%s2 + $0x28] sm:$0xff]
    %v70 = vld [vmem:[%s2 + $0x30] sm:$0xff]
    %v71 = vld [vmem:[%s2 + $0x38] sm:$0xff]
    %v72 = vld [vmem:[%s2 + $0x40] sm:$0xff]
    %v73 = vld [vmem:[%s2 + $0x48] sm:$0xff]
    %v74 = vld [vmem:[%s2 + $0x50] sm:$0xff]
    %v75 = vld [vmem:[%s2 + $0x58] sm:$0xff]
    %v76 = vld [vmem:[%s2 + $0x60] sm:$0xff]
    %v77 = vld [vmem:[%s2 + $0x68] sm:$0xff]
    %v78 = vld [vmem:[%s2 + $0x70] sm:$0xff]
    %v79 = vld [vmem:[%s2 + $0x78] sm:$0xff]
    %81 = vset.pattern.permute.xlu0 0
    %82 = vperm.xlu0 %81, %v48
    %v83 = vpop.permute.xlu0 %82
    %86 = vset.pattern.permute.xlu0 0
    %87 = vperm.xlu0 %86, %v49
    %v88 = vpop.permute.xlu0 %87
    %91 = vset.pattern.permute.xlu0 0
    %92 = vperm.xlu0 %91, %v50
    %v93 = vpop.permute.xlu0 %92
    %96 = vset.pattern.permute.xlu0 0
    %97 = vperm.xlu0 %96, %v51
    %v98 = vpop.permute.xlu0 %97
    %101 = vset.pattern.permute.xlu0 0
    %102 = vperm.xlu0 %101, %v52
    %v103 = vpop.permute.xlu0 %102
    %106 = vset.pattern.permute.xlu0 0
    %107 = vperm.xlu0 %106, %v53
    %v108 = vpop.permute.xlu0 %107
    %111 = vset.pattern.permute.xlu0 0
    %112 = vperm.xlu0 %111, %v54
    %v113 = vpop.permute.xlu0 %112
    %116 = vset.pattern.permute.xlu0 0
    %117 = vperm.xlu0 %116, %v55
    %v118 = vpop.permute.xlu0 %117
    %121 = vset.pattern.permute.xlu0 0
    %122 = vperm.xlu0 %121, %v56
    %v123 = vpop.permute.xlu0 %122
    %126 = vset.pattern.permute.xlu0 0
    %127 = vperm.xlu0 %126, %v57
    %v128 = vpop.permute.xlu0 %127
    %131 = vset.pattern.permute.xlu0 0
    %132 = vperm.xlu0 %131, %v58
    %v133 = vpop.permute.xlu0 %132
    %136 = vset.pattern.permute.xlu0 0
    %137 = vperm.xlu0 %136, %v59
    %v138 = vpop.permute.xlu0 %137
    %141 = vset.pattern.permute.xlu0 0
    %142 = vperm.xlu0 %141, %v60
    %v143 = vpop.permute.xlu0 %142
    %146 = vset.pattern.permute.xlu0 0
    %147 = vperm.xlu0 %146, %v61
    %v148 = vpop.permute.xlu0 %147
    %151 = vset.pattern.permute.xlu0 0
    %152 = vperm.xlu0 %151, %v62
    %v153 = vpop.permute.xlu0 %152
    %156 = vset.pattern.permute.xlu0 0
    %157 = vperm.xlu0 %156, %v63
    %v158 = vpop.permute.xlu0 %157
    %v161 = vlaneseq
    %v162 = vshrl.u32 %v161, 7
    %v163 = vsub.s32 0, %v162
    %v164 = vrot.slane %v47, %v163
    %v165 = vlaneseq
    %v166 = vshrl.u32 %v165, 7
    %v167 = vsub.s32 1, %v166
    %v168 = vrot.slane %v47, %v167
    %v169 = vlaneseq
    %v170 = vshrl.u32 %v169, 7
    %v171 = vsub.s32 2, %v170
    %v172 = vrot.slane %v47, %v171
    %v173 = vlaneseq
    %v174 = vshrl.u32 %v173, 7
    %v175 = vsub.s32 3, %v174
    %v176 = vrot.slane %v47, %v175
    %v181 = vmul.f32 %v83, %v164
    %v182 = vmul.f32 %v83, %v168
    %v183 = vmul.f32 %v83, %v172
    %v184 = vmul.f32 %v83, %v176
    %v185 = vmul.f32 %v88, %v164
    %v186 = vmul.f32 %v88, %v168
    %v187 = vmul.f32 %v88, %v172
    %v188 = vmul.f32 %v88, %v176
    %v189 = vmul.f32 %v93, %v164
    %v190 = vmul.f32 %v93, %v168
    %v191 = vmul.f32 %v93, %v172
    %v192 = vmul.f32 %v93, %v176
    %v193 = vmul.f32 %v98, %v164
    %v194 = vmul.f32 %v98, %v168
    %v195 = vmul.f32 %v98, %v172
    %v196 = vmul.f32 %v98, %v176
    %v197 = vmul.f32 %v103, %v164
    %v198 = vmul.f32 %v103, %v168
    %v199 = vmul.f32 %v103, %v172
    %v200 = vmul.f32 %v103, %v176
    %v201 = vmul.f32 %v108, %v164
    %v202 = vmul.f32 %v108, %v168
    %v203 = vmul.f32 %v108, %v172
    %v204 = vmul.f32 %v108, %v176
    %v205 = vmul.f32 %v113, %v164
    %v206 = vmul.f32 %v113, %v168
    %v207 = vmul.f32 %v113, %v172
    %v208 = vmul.f32 %v113, %v176
    %v209 = vmul.f32 %v118, %v164
    %v210 = vmul.f32 %v118, %v168
    %v211 = vmul.f32 %v118, %v172
    %v212 = vmul.f32 %v118, %v176
    %v213 = vmul.f32 %v123, %v164
    %v214 = vmul.f32 %v123, %v168
    %v215 = vmul.f32 %v123, %v172
    %v216 = vmul.f32 %v123, %v176
    %v217 = vmul.f32 %v128, %v164
    %v218 = vmul.f32 %v128, %v168
    %v219 = vmul.f32 %v128, %v172
    %v220 = vmul.f32 %v128, %v176
    %v221 = vmul.f32 %v133, %v164
    %v222 = vmul.f32 %v133, %v168
    %v223 = vmul.f32 %v133, %v172
    %v224 = vmul.f32 %v133, %v176
    %v225 = vmul.f32 %v138, %v164
    %v226 = vmul.f32 %v138, %v168
    %v227 = vmul.f32 %v138, %v172
    %v228 = vmul.f32 %v138, %v176
    %v229 = vmul.f32 %v143, %v164
    %v230 = vmul.f32 %v143, %v168
    %v231 = vmul.f32 %v143, %v172
    %v232 = vmul.f32 %v143, %v176
    %v233 = vmul.f32 %v148, %v164
    %v234 = vmul.f32 %v148, %v168
    %v235 = vmul.f32 %v148, %v172
    %v236 = vmul.f32 %v148, %v176
    %v237 = vmul.f32 %v153, %v164
    %v238 = vmul.f32 %v153, %v168
    %v239 = vmul.f32 %v153, %v172
    %v240 = vmul.f32 %v153, %v176
    %v241 = vmul.f32 %v158, %v164
    %v242 = vmul.f32 %v158, %v168
    %v243 = vmul.f32 %v158, %v172
    %v244 = vmul.f32 %v158, %v176
    %246 = vset.pattern.permute.xlu0 0
    %247 = vperm.xlu0 %246, %v64
    %v248 = vpop.permute.xlu0 %247
    %251 = vset.pattern.permute.xlu0 0
    %252 = vperm.xlu0 %251, %v65
    %v253 = vpop.permute.xlu0 %252
    %256 = vset.pattern.permute.xlu0 0
    %257 = vperm.xlu0 %256, %v66
    %v258 = vpop.permute.xlu0 %257
    %261 = vset.pattern.permute.xlu0 0
    %262 = vperm.xlu0 %261, %v67
    %v263 = vpop.permute.xlu0 %262
    %266 = vset.pattern.permute.xlu0 0
    %267 = vperm.xlu0 %266, %v68
    %v268 = vpop.permute.xlu0 %267
    %271 = vset.pattern.permute.xlu0 0
    %272 = vperm.xlu0 %271, %v69
    %v273 = vpop.permute.xlu0 %272
    %276 = vset.pattern.permute.xlu0 0
    %277 = vperm.xlu0 %276, %v70
    %v278 = vpop.permute.xlu0 %277
    %281 = vset.pattern.permute.xlu0 0
    %282 = vperm.xlu0 %281, %v71
    %v283 = vpop.permute.xlu0 %282
    %286 = vset.pattern.permute.xlu0 0
    %287 = vperm.xlu0 %286, %v72
    %v288 = vpop.permute.xlu0 %287
    %291 = vset.pattern.permute.xlu0 0
    %292 = vperm.xlu0 %291, %v73
    %v293 = vpop.permute.xlu0 %292
    %296 = vset.pattern.permute.xlu0 0
    %297 = vperm.xlu0 %296, %v74
    %v298 = vpop.permute.xlu0 %297
    %301 = vset.pattern.permute.xlu0 0
    %302 = vperm.xlu0 %301, %v75
    %v303 = vpop.permute.xlu0 %302
    %306 = vset.pattern.permute.xlu0 0
    %307 = vperm.xlu0 %306, %v76
    %v308 = vpop.permute.xlu0 %307
    %311 = vset.pattern.permute.xlu0 0
    %312 = vperm.xlu0 %311, %v77
    %v313 = vpop.permute.xlu0 %312
    %316 = vset.pattern.permute.xlu0 0
    %317 = vperm.xlu0 %316, %v78
    %v318 = vpop.permute.xlu0 %317
    %321 = vset.pattern.permute.xlu0 0
    %322 = vperm.xlu0 %321, %v79
    %v323 = vpop.permute.xlu0 %322
    %v325 = vadd.f32 %v181, %v248
    %v326 = vadd.f32 %v182, %v248
    %v327 = vadd.f32 %v183, %v248
    %v328 = vadd.f32 %v184, %v248
    %v329 = vadd.f32 %v185, %v253
    %v330 = vadd.f32 %v186, %v253
    %v331 = vadd.f32 %v187, %v253
    %v332 = vadd.f32 %v188, %v253
    %v333 = vadd.f32 %v189, %v258
    %v334 = vadd.f32 %v190, %v258
    %v335 = vadd.f32 %v191, %v258
    %v336 = vadd.f32 %v192, %v258
    %v337 = vadd.f32 %v193, %v263
    %v338 = vadd.f32 %v194, %v263
    %v339 = vadd.f32 %v195, %v263
    %v340 = vadd.f32 %v196, %v263
    %v341 = vadd.f32 %v197, %v268
    %v342 = vadd.f32 %v198, %v268
    %v343 = vadd.f32 %v199, %v268
    %v344 = vadd.f32 %v200, %v268
    %v345 = vadd.f32 %v201, %v273
    %v346 = vadd.f32 %v202, %v273
    %v347 = vadd.f32 %v203, %v273
    %v348 = vadd.f32 %v204, %v273
    %v349 = vadd.f32 %v205, %v278
    %v350 = vadd.f32 %v206, %v278
    %v351 = vadd.f32 %v207, %v278
    %v352 = vadd.f32 %v208, %v278
    %v353 = vadd.f32 %v209, %v283
    %v354 = vadd.f32 %v210, %v283
    %v355 = vadd.f32 %v211, %v283
    %v356 = vadd.f32 %v212, %v283
    %v357 = vadd.f32 %v213, %v288
    %v358 = vadd.f32 %v214, %v288
    %v359 = vadd.f32 %v215, %v288
    %v360 = vadd.f32 %v216, %v288
    %v361 = vadd.f32 %v217, %v293
    %v362 = vadd.f32 %v218, %v293
    %v363 = vadd.f32 %v219, %v293
    %v364 = vadd.f32 %v220, %v293
    %v365 = vadd.f32 %v221, %v298
    %v366 = vadd.f32 %v222, %v298
    %v367 = vadd.f32 %v223, %v298
    %v368 = vadd.f32 %v224, %v298
    %v369 = vadd.f32 %v225, %v303
    %v370 = vadd.f32 %v226, %v303
    %v371 = vadd.f32 %v227, %v303
    %v372 = vadd.f32 %v228, %v303
    %v373 = vadd.f32 %v229, %v308
    %v374 = vadd.f32 %v230, %v308
    %v375 = vadd.f32 %v231, %v308
    %v376 = vadd.f32 %v232, %v308
    %v377 = vadd.f32 %v233, %v313
    %v378 = vadd.f32 %v234, %v313
    %v379 = vadd.f32 %v235, %v313
    %v380 = vadd.f32 %v236, %v313
    %v381 = vadd.f32 %v237, %v318
    %v382 = vadd.f32 %v238, %v318
    %v383 = vadd.f32 %v239, %v318
    %v384 = vadd.f32 %v240, %v318
    %v385 = vadd.f32 %v241, %v323
    %v386 = vadd.f32 %v242, %v323
    %v387 = vadd.f32 %v243, %v323
    %v388 = vadd.f32 %v244, %v323
    %v389 = vmax.f32 %v325, 0.0
    %v390 = vmax.f32 %v326, 0.0
    %v391 = vmax.f32 %v327, 0.0
    %v392 = vmax.f32 %v328, 0.0
    %v393 = vmax.f32 %v329, 0.0
    %v394 = vmax.f32 %v330, 0.0
    %v395 = vmax.f32 %v331, 0.0
    %v396 = vmax.f32 %v332, 0.0
    %v397 = vmax.f32 %v333, 0.0
    %v398 = vmax.f32 %v334, 0.0
    %v399 = vmax.f32 %v335, 0.0
    %v400 = vmax.f32 %v336, 0.0
    %v401 = vmax.f32 %v337, 0.0
    %v402 = vmax.f32 %v338, 0.0
    %v403 = vmax.f32 %v339, 0.0
    %v404 = vmax.f32 %v340, 0.0
    %v405 = vmax.f32 %v341, 0.0
    %v406 = vmax.f32 %v342, 0.0
    %v407 = vmax.f32 %v343, 0.0
    %v408 = vmax.f32 %v344, 0.0
    %v409 = vmax.f32 %v345, 0.0
    %v410 = vmax.f32 %v346, 0.0
    %v411 = vmax.f32 %v347, 0.0
    %v412 = vmax.f32 %v348, 0.0
    %v413 = vmax.f32 %v349, 0.0
    %v414 = vmax.f32 %v350, 0.0
    %v415 = vmax.f32 %v351, 0.0
    %v416 = vmax.f32 %v352, 0.0
    %v417 = vmax.f32 %v353, 0.0
    %v418 = vmax.f32 %v354, 0.0
    %v419 = vmax.f32 %v355, 0.0
    %v420 = vmax.f32 %v356, 0.0
    %v421 = vmax.f32 %v357, 0.0
    %v422 = vmax.f32 %v358, 0.0
    %v423 = vmax.f32 %v359, 0.0
    %v424 = vmax.f32 %v360, 0.0
    %v425 = vmax.f32 %v361, 0.0
    %v426 = vmax.f32 %v362, 0.0
    %v427 = vmax.f32 %v363, 0.0
    %v428 = vmax.f32 %v364, 0.0
    %v429 = vmax.f32 %v365, 0.0
    %v430 = vmax.f32 %v366, 0.0
    %v431 = vmax.f32 %v367, 0.0
    %v432 = vmax.f32 %v368, 0.0
    %v433 = vmax.f32 %v369, 0.0
    %v434 = vmax.f32 %v370, 0.0
    %v435 = vmax.f32 %v371, 0.0
    %v436 = vmax.f32 %v372, 0.0
    %v437 = vmax.f32 %v373, 0.0
    %v438 = vmax.f32 %v374, 0.0
    %v439 = vmax.f32 %v375, 0.0
    %v440 = vmax.f32 %v376, 0.0
    %v441 = vmax.f32 %v377, 0.0
    %v442 = vmax.f32 %v378, 0.0
    %v443 = vmax.f32 %v379, 0.0
    %v444 = vmax.f32 %v380, 0.0
    %v445 = vmax.f32 %v381, 0.0
    %v446 = vmax.f32 %v382, 0.0
    %v447 = vmax.f32 %v383, 0.0
    %v448 = vmax.f32 %v384, 0.0
    %v449 = vmax.f32 %v385, 0.0
    %v450 = vmax.f32 %v386, 0.0
    %v451 = vmax.f32 %v387, 0.0
    %v452 = vmax.f32 %v388, 0.0
    %v453 = vld [vmem:[%s3] sm:$0xff]
    %v454 = vld [vmem:[%s3 + $0x8] sm:$0xff]
    %v455 = vld [vmem:[%s3 + $0x10] sm:$0xff]
    %v456 = vld [vmem:[%s3 + $0x18] sm:$0xff]
    %v457 = vld [vmem:[%s3 + $0x20] sm:$0xff]
    %v458 = vld [vmem:[%s3 + $0x28] sm:$0xff]
    %v459 = vld [vmem:[%s3 + $0x30] sm:$0xff]
    %v460 = vld [vmem:[%s3 + $0x38] sm:$0xff]
    %v461 = vld [vmem:[%s3 + $0x40] sm:$0xff]
    %v462 = vld [vmem:[%s3 + $0x48] sm:$0xff]
    %v463 = vld [vmem:[%s3 + $0x50] sm:$0xff]
    %v464 = vld [vmem:[%s3 + $0x58] sm:$0xff]
    %v465 = vld [vmem:[%s4] sm:$0xff]
    %v466 = vld [vmem:[%s4 + $0x8] sm:$0xff]
    %v467 = vld [vmem:[%s4 + $0x10] sm:$0xff]
    %v468 = vld [vmem:[%s4 + $0x18] sm:$0xff]
    %v469 = vld [vmem:[%s4 + $0x20] sm:$0xff]
    %v470 = vld [vmem:[%s4 + $0x28] sm:$0xff]
    %v471 = vld [vmem:[%s4 + $0x30] sm:$0xff]
    %v472 = vld [vmem:[%s4 + $0x38] sm:$0xff]
    %v473 = vld [vmem:[%s4 + $0x40] sm:$0xff]
    %v474 = vld [vmem:[%s4 + $0x48] sm:$0xff]
    %v475 = vld [vmem:[%s4 + $0x50] sm:$0xff]
    %v476 = vld [vmem:[%s4 + $0x58] sm:$0xff]
    %478 = vset.pattern.permute.xlu0 0
    %479 = vperm.xlu0 %478, %v465
    %v480 = vpop.permute.xlu0 %479
    %483 = vset.pattern.permute.xlu0 0
    %484 = vperm.xlu0 %483, %v466
    %v485 = vpop.permute.xlu0 %484
    %488 = vset.pattern.permute.xlu0 0
    %489 = vperm.xlu0 %488, %v467
    %v490 = vpop.permute.xlu0 %489
    %493 = vset.pattern.permute.xlu0 0
    %494 = vperm.xlu0 %493, %v468
    %v495 = vpop.permute.xlu0 %494
    %498 = vset.pattern.permute.xlu0 0
    %499 = vperm.xlu0 %498, %v469
    %v500 = vpop.permute.xlu0 %499
    %503 = vset.pattern.permute.xlu0 0
    %504 = vperm.xlu0 %503, %v470
    %v505 = vpop.permute.xlu0 %504
    %508 = vset.pattern.permute.xlu0 0
    %509 = vperm.xlu0 %508, %v471
    %v510 = vpop.permute.xlu0 %509
    %513 = vset.pattern.permute.xlu0 0
    %514 = vperm.xlu0 %513, %v472
    %v515 = vpop.permute.xlu0 %514
    %518 = vset.pattern.permute.xlu0 0
    %519 = vperm.xlu0 %518, %v473
    %v520 = vpop.permute.xlu0 %519
    %523 = vset.pattern.permute.xlu0 0
    %524 = vperm.xlu0 %523, %v474
    %v525 = vpop.permute.xlu0 %524
    %528 = vset.pattern.permute.xlu0 0
    %529 = vperm.xlu0 %528, %v475
    %v530 = vpop.permute.xlu0 %529
    %533 = vset.pattern.permute.xlu0 0
    %534 = vperm.xlu0 %533, %v476
    %v535 = vpop.permute.xlu0 %534
    %537 = vmatprep.subr.mxu0 %v390
    %538 = vmatpush1.msra.mxu0 %v389
    %539 = vmatprep.subr.mxu0 %v394
    %540 = vmatpush1.msra.mxu0 %v393
    %541 = vmatprep.subr.mxu0 %v398
    %542 = vmatpush1.msra.mxu0 %v397
    %543 = vmatprep.subr.mxu0 %v402
    %544 = vmatpush1.msra.mxu0 %v401
    %545 = vmatprep.subr.mxu0 %v406
    %546 = vmatpush1.msra.mxu0 %v405
    %547 = vmatprep.subr.mxu0 %v410
    %548 = vmatpush1.msra.mxu0 %v409
    %549 = vmatprep.subr.mxu0 %v414
    %550 = vmatpush1.msra.mxu0 %v413
    %551 = vmatprep.subr.mxu0 %v418
    %552 = vmatpush1.msra.mxu0 %v417
    %553 = vmatprep.subr.mxu0 %v422
    %554 = vmatpush1.msra.mxu0 %v421
    %555 = vmatprep.subr.mxu0 %v426
    %556 = vmatpush1.msra.mxu0 %v425
    %557 = vmatprep.subr.mxu0 %v430
    %558 = vmatpush1.msra.mxu0 %v429
    %559 = vmatprep.subr.mxu0 %v434
    %560 = vmatpush1.msra.mxu0 %v433
    %561 = vmatprep.subr.mxu0 %v438
    %562 = vmatpush1.msra.mxu0 %v437
    %563 = vmatprep.subr.mxu0 %v442
    %564 = vmatpush1.msra.mxu0 %v441
    %565 = vmatprep.subr.mxu0 %v446
    %566 = vmatpush1.msra.mxu0 %v445
    %567 = vmatprep.subr.mxu0 %v450
    %568 = vmatpush1.msra.mxu0 %v449
    %569 = vmatprep.subr.mxu0 0.0
    %570 = vmatpush1.msra.mxu0 0.0
    %571 = vmatprep.subr.mxu0 0.0
    %572 = vmatpush1.msra.mxu0 0.0
    %573 = vmatprep.subr.mxu0 0.0
    %574 = vmatpush1.msra.mxu0 0.0
    %575 = vmatprep.subr.mxu0 0.0
    %576 = vmatpush1.msra.mxu0 0.0
    %577 = vmatprep.subr.mxu0 0.0
    %578 = vmatpush1.msra.mxu0 0.0
    %579 = vmatprep.subr.mxu0 0.0
    %580 = vmatpush1.msra.mxu0 0.0
    %581 = vmatprep.subr.mxu0 0.0
    %582 = vmatpush1.msra.mxu0 0.0
    %583 = vmatprep.subr.mxu0 0.0
    %584 = vmatpush1.msra.mxu0 0.0
    %585 = vmatprep.subr.mxu0 0.0
    %586 = vmatpush1.msra.mxu0 0.0
    %587 = vmatprep.subr.mxu0 0.0
    %588 = vmatpush1.msra.mxu0 0.0
    %589 = vmatprep.subr.mxu0 0.0
    %590 = vmatpush1.msra.mxu0 0.0
    %591 = vmatprep.subr.mxu0 0.0
    %592 = vmatpush1.msra.mxu0 0.0
    %593 = vmatprep.subr.mxu0 0.0
    %594 = vmatpush1.msra.mxu0 0.0
    %595 = vmatprep.subr.mxu0 0.0
    %596 = vmatpush1.msra.mxu0 0.0
    %597 = vmatprep.subr.mxu0 0.0
    %598 = vmatpush1.msra.mxu0 0.0
    %599 = vmatprep.subr.mxu0 0.0
    %600 = vmatpush1.msra.mxu0 0.0
    %601 = vmatprep.mubr.f32.mxu0 0.0
    %602 = vmatmul.mubr.f32.gmra.mrb[0].mxu0 %v453
    %v603 = vpop.f32.mrb[0].mxu0
    %v604 = vadd.f32 %v480, %v603
    %v605 = vpop.f32.mrb[0].mxu0
    %v606 = vadd.f32 %v480, %v605
    %607 = vmatprep.mubr.f32.mxu0 0.0
    %608 = vmatmul.mubr.f32.gmra.mrb[0].mxu0 %v454
    %v609 = vpop.f32.mrb[0].mxu0
    %v610 = vadd.f32 %v485, %v609
    %v611 = vpop.f32.mrb[0].mxu0
    %v612 = vadd.f32 %v485, %v611
    %613 = vmatprep.mubr.f32.mxu0 0.0
    %614 = vmatmul.mubr.f32.gmra.mrb[0].mxu0 %v455
    %v615 = vpop.f32.mrb[0].mxu0
    %v616 = vadd.f32 %v490, %v615
    %v617 = vpop.f32.mrb[0].mxu0
    %v618 = vadd.f32 %v490, %v617
    %619 = vmatprep.mubr.f32.mxu0 0.0
    %620 = vmatmul.mubr.f32.gmra.mrb[0].mxu0 %v456
    %v621 = vpop.f32.mrb[0].mxu0
    %v622 = vadd.f32 %v495, %v621
    %v623 = vpop.f32.mrb[0].mxu0
    %v624 = vadd.f32 %v495, %v623
    %625 = vmatprep.mubr.f32.mxu0 0.0
    %626 = vmatmul.mubr.f32.gmra.mrb[0].mxu0 %v457
    %v627 = vpop.f32.mrb[0].mxu0
    %v628 = vadd.f32 %v500, %v627
    %v629 = vpop.f32.mrb[0].mxu0
    %v630 = vadd.f32 %v500, %v629
    %631 = vmatprep.mubr.f32.mxu0 0.0
    %632 = vmatmul.mubr.f32.gmra.mrb[0].mxu0 %v458
    %v633 = vpop.f32.mrb[0].mxu0
    %v634 = vadd.f32 %v505, %v633
    %v635 = vpop.f32.mrb[0].mxu0
    %v636 = vadd.f32 %v505, %v635
    %637 = vmatprep.mubr.f32.mxu0 0.0
    %638 = vmatmul.mubr.f32.gmra.mrb[0].mxu0 %v459
    %v639 = vpop.f32.mrb[0].mxu0
    %v640 = vadd.f32 %v510, %v639
    %v641 = vpop.f32.mrb[0].mxu0
    %v642 = vadd.f32 %v510, %v641
    %643 = vmatprep.mubr.f32.mxu0 0.0
    %644 = vmatmul.mubr.f32.gmra.mrb[0].mxu0 %v460
    %v645 = vpop.f32.mrb[0].mxu0
    %v646 = vadd.f32 %v515, %v645
    %v647 = vpop.f32.mrb[0].mxu0
    %v648 = vadd.f32 %v515, %v647
    %649 = vmatprep.mubr.f32.mxu0 0.0
    %650 = vmatmul.mubr.f32.gmra.mrb[0].mxu0 %v461
    %v651 = vpop.f32.mrb[0].mxu0
    %v652 = vadd.f32 %v520, %v651
    %v653 = vpop.f32.mrb[0].mxu0
    %v654 = vadd.f32 %v520, %v653
    %655 = vmatprep.mubr.f32.mxu0 0.0
    %656 = vmatmul.mubr.f32.gmra.mrb[0].mxu0 %v462
    %v657 = vpop.f32.mrb[0].mxu0
    %v658 = vadd.f32 %v525, %v657
    %v659 = vpop.f32.mrb[0].mxu0
    %v660 = vadd.f32 %v525, %v659
    %661 = vmatprep.mubr.f32.mxu0 0.0
    %662 = vmatmul.mubr.f32.gmra.mrb[0].mxu0 %v463
    %v663 = vpop.f32.mrb[0].mxu0
    %v664 = vadd.f32 %v530, %v663
    %v665 = vpop.f32.mrb[0].mxu0
    %v666 = vadd.f32 %v530, %v665
    %667 = vmatprep.mubr.f32.mxu0 0.0
    %668 = vmatmul.mubr.f32.gmra.mrb[0].mxu0 %v464
    %v669 = vpop.f32.mrb[0].mxu0
    %v670 = vadd.f32 %v535, %v669
    %v671 = vpop.f32.mrb[0].mxu0
    %v672 = vadd.f32 %v535, %v671
    %673 = vdwg.mxu0
    %674 = vmatprep.subr.mxu0 %v392
    %675 = vmatpush1.msra.mxu0 %v391
    %676 = vmatprep.subr.mxu0 %v396
    %677 = vmatpush1.msra.mxu0 %v395
    %678 = vmatprep.subr.mxu0 %v400
    %679 = vmatpush1.msra.mxu0 %v399
    %680 = vmatprep.subr.mxu0 %v404
    %681 = vmatpush1.msra.mxu0 %v403
    %682 = vmatprep.subr.mxu0 %v408
    %683 = vmatpush1.msra.mxu0 %v407
    %684 = vmatprep.subr.mxu0 %v412
    %685 = vmatpush1.msra.mxu0 %v411
    %686 = vmatprep.subr.mxu0 %v416
    %687 = vmatpush1.msra.mxu0 %v415
    %688 = vmatprep.subr.mxu0 %v420
    %689 = vmatpush1.msra.mxu0 %v419
    %690 = vmatprep.subr.mxu0 %v424
    %691 = vmatpush1.msra.mxu0 %v423
    %692 = vmatprep.subr.mxu0 %v428
    %693 = vmatpush1.msra.mxu0 %v427
    %694 = vmatprep.subr.mxu0 %v432
    %695 = vmatpush1.msra.mxu0 %v431
    %696 = vmatprep.subr.mxu0 %v436
    %697 = vmatpush1.msra.mxu0 %v435
    %698 = vmatprep.subr.mxu0 %v440
    %699 = vmatpush1.msra.mxu0 %v439
    %700 = vmatprep.subr.mxu0 %v444
    %701 = vmatpush1.msra.mxu0 %v443
    %702 = vmatprep.subr.mxu0 %v448
    %703 = vmatpush1.msra.mxu0 %v447
    %704 = vmatprep.subr.mxu0 %v452
    %705 = vmatpush1.msra.mxu0 %v451
    %706 = vmatprep.subr.mxu0 0.0
    %707 = vmatpush1.msra.mxu0 0.0
    %708 = vmatprep.subr.mxu0 0.0
    %709 = vmatpush1.msra.mxu0 0.0
    %710 = vmatprep.subr.mxu0 0.0
    %711 = vmatpush1.msra.mxu0 0.0
    %712 = vmatprep.subr.mxu0 0.0
    %713 = vmatpush1.msra.mxu0 0.0
    %714 = vmatprep.subr.mxu0 0.0
    %715 = vmatpush1.msra.mxu0 0.0
    %716 = vmatprep.subr.mxu0 0.0
    %717 = vmatpush1.msra.mxu0 0.0
    %718 = vmatprep.subr.mxu0 0.0
    %719 = vmatpush1.msra.mxu0 0.0
    %720 = vmatprep.subr.mxu0 0.0
    %721 = vmatpush1.msra.mxu0 0.0
    %722 = vmatprep.subr.mxu0 0.0
    %723 = vmatpush1.msra.mxu0 0.0
    %724 = vmatprep.subr.mxu0 0.0
    %725 = vmatpush1.msra.mxu0 0.0
    %726 = vmatprep.subr.mxu0 0.0
    %727 = vmatpush1.msra.mxu0 0.0
    %728 = vmatprep.subr.mxu0 0.0
    %729 = vmatpush1.msra.mxu0 0.0
    %730 = vmatprep.subr.mxu0 0.0
    %731 = vmatpush1.msra.mxu0 0.0
    %732 = vmatprep.subr.mxu0 0.0
    %733 = vmatpush1.msra.mxu0 0.0
    %734 = vmatprep.subr.mxu0 0.0
    %735 = vmatpush1.msra.mxu0 0.0
    %736 = vmatprep.subr.mxu0 0.0
    %737 = vmatpush1.msra.mxu0 0.0
    %738 = vmatprep.mubr.f32.mxu0 0.0
    %739 = vmatmul.mubr.f32.gmra.mrb[0].mxu0 %v453
    %v740 = vpop.f32.mrb[0].mxu0
    %v741 = vadd.f32 %v480, %v740
    %v742 = vpop.f32.mrb[0].mxu0
    %v743 = vadd.f32 %v480, %v742
    %744 = vmatprep.mubr.f32.mxu0 0.0
    %745 = vmatmul.mubr.f32.gmra.mrb[0].mxu0 %v454
    %v746 = vpop.f32.mrb[0].mxu0
    %v747 = vadd.f32 %v485, %v746
    %v748 = vpop.f32.mrb[0].mxu0
    %v749 = vadd.f32 %v485, %v748
    %750 = vmatprep.mubr.f32.mxu0 0.0
    %751 = vmatmul.mubr.f32.gmra.mrb[0].mxu0 %v455
    %v752 = vpop.f32.mrb[0].mxu0
    %v753 = vadd.f32 %v490, %v752
    %v754 = vpop.f32.mrb[0].mxu0
    %v755 = vadd.f32 %v490, %v754
    %756 = vmatprep.mubr.f32.mxu0 0.0
    %757 = vmatmul.mubr.f32.gmra.mrb[0].mxu0 %v456
    %v758 = vpop.f32.mrb[0].mxu0
    %v759 = vadd.f32 %v495, %v758
    %v760 = vpop.f32.mrb[0].mxu0
    %v761 = vadd.f32 %v495, %v760
    %762 = vmatprep.mubr.f32.mxu0 0.0
    %763 = vmatmul.mubr.f32.gmra.mrb[0].mxu0 %v457
    %v764 = vpop.f32.mrb[0].mxu0
    %v765 = vadd.f32 %v500, %v764
    %v766 = vpop.f32.mrb[0].mxu0
    %v767 = vadd.f32 %v500, %v766
    %768 = vmatprep.mubr.f32.mxu0 0.0
    %769 = vmatmul.mubr.f32.gmra.mrb[0].mxu0 %v458
    %v770 = vpop.f32.mrb[0].mxu0
    %v771 = vadd.f32 %v505, %v770
    %v772 = vpop.f32.mrb[0].mxu0
    %v773 = vadd.f32 %v505, %v772
    %774 = vmatprep.mubr.f32.mxu0 0.0
    %775 = vmatmul.mubr.f32.gmra.mrb[0].mxu0 %v459
    %v776 = vpop.f32.mrb[0].mxu0
    %v777 = vadd.f32 %v510, %v776
    %v778 = vpop.f32.mrb[0].mxu0
    %v779 = vadd.f32 %v510, %v778
    %780 = vmatprep.mubr.f32.mxu0 0.0
    %781 = vmatmul.mubr.f32.gmra.mrb[0].mxu0 %v460
    %v782 = vpop.f32.mrb[0].mxu0
    %v783 = vadd.f32 %v515, %v782
    %v784 = vpop.f32.mrb[0].mxu0
    %v785 = vadd.f32 %v515, %v784
    %786 = vmatprep.mubr.f32.mxu0 0.0
    %787 = vmatmul.mubr.f32.gmra.mrb[0].mxu0 %v461
    %v788 = vpop.f32.mrb[0].mxu0
    %v789 = vadd.f32 %v520, %v788
    %v790 = vpop.f32.mrb[0].mxu0
    %v791 = vadd.f32 %v520, %v790
    %792 = vmatprep.mubr.f32.mxu0 0.0
    %793 = vmatmul.mubr.f32.gmra.mrb[0].mxu0 %v462
    %v794 = vpop.f32.mrb[0].mxu0
    %v795 = vadd.f32 %v525, %v794
    %v796 = vpop.f32.mrb[0].mxu0
    %v797 = vadd.f32 %v525, %v796
    %798 = vmatprep.mubr.f32.mxu0 0.0
    %799 = vmatmul.mubr.f32.gmra.mrb[0].mxu0 %v463
    %v800 = vpop.f32.mrb[0].mxu0
    %v801 = vadd.f32 %v530, %v800
    %v802 = vpop.f32.mrb[0].mxu0
    %v803 = vadd.f32 %v530, %v802
    %804 = vmatprep.mubr.f32.mxu0 0.0
    %805 = vmatmul.mubr.f32.gmra.mrb[0].mxu0 %v464
    %v806 = vpop.f32.mrb[0].mxu0
    %v807 = vadd.f32 %v535, %v806
    %v808 = vpop.f32.mrb[0].mxu0
    %v809 = vadd.f32 %v535, %v808
    %810 = vdwg.mxu0
    %v811 = vmax.f32 %v604, 0.0
    %v812 = vmax.f32 %v606, 0.0
    %v813 = vmax.f32 %v741, 0.0
    %v814 = vmax.f32 %v743, 0.0
    %v815 = vmax.f32 %v610, 0.0
    %v816 = vmax.f32 %v612, 0.0
    %v817 = vmax.f32 %v747, 0.0
    %v818 = vmax.f32 %v749, 0.0
    %v819 = vmax.f32 %v616, 0.0
    %v820 = vmax.f32 %v618, 0.0
    %v821 = vmax.f32 %v753, 0.0
    %v822 = vmax.f32 %v755, 0.0
    %v823 = vmax.f32 %v622, 0.0
    %v824 = vmax.f32 %v624, 0.0
    %v825 = vmax.f32 %v759, 0.0
    %v826 = vmax.f32 %v761, 0.0
    %v827 = vmax.f32 %v628, 0.0
    %v828 = vmax.f32 %v630, 0.0
    %v829 = vmax.f32 %v765, 0.0
    %v830 = vmax.f32 %v767, 0.0
    %v831 = vmax.f32 %v634, 0.0
    %v832 = vmax.f32 %v636, 0.0
    %v833 = vmax.f32 %v771, 0.0
    %v834 = vmax.f32 %v773, 0.0
    %v835 = vmax.f32 %v640, 0.0
    %v836 = vmax.f32 %v642, 0.0
    %v837 = vmax.f32 %v777, 0.0
    %v838 = vmax.f32 %v779, 0.0
    %v839 = vmax.f32 %v646, 0.0
    %v840 = vmax.f32 %v648, 0.0
    %v841 = vmax.f32 %v783, 0.0
    %v842 = vmax.f32 %v785, 0.0
    %v843 = vmax.f32 %v652, 0.0
    %v844 = vmax.f32 %v654, 0.0
    %v845 = vmax.f32 %v789, 0.0
    %v846 = vmax.f32 %v791, 0.0
    %v847 = vmax.f32 %v658, 0.0
    %v848 = vmax.f32 %v660, 0.0
    %v849 = vmax.f32 %v795, 0.0
    %v850 = vmax.f32 %v797, 0.0
    %v851 = vmax.f32 %v664, 0.0
    %v852 = vmax.f32 %v666, 0.0
    %v853 = vmax.f32 %v801, 0.0
    %v854 = vmax.f32 %v803, 0.0
    %v855 = vmax.f32 %v670, 0.0
    %v856 = vmax.f32 %v672, 0.0
    %v857 = vmax.f32 %v807, 0.0
    %v858 = vmax.f32 %v809, 0.0
    %v859 = vld [vmem:[%s5] sm:$0xff]
    %v860 = vld [vmem:[%s5 + $0x8] sm:$0xff]
    %v861 = vld [vmem:[%s5 + $0x10] sm:$0xff]
    %v862 = vld [vmem:[%s5 + $0x18] sm:$0xff]
    %v863 = vld [vmem:[%s5 + $0x20] sm:$0xff]
    %v864 = vld [vmem:[%s5 + $0x28] sm:$0xff]
    %v865 = vld [vmem:[%s5 + $0x30] sm:$0xff]
    %v866 = vld [vmem:[%s5 + $0x38] sm:$0xff]
    %v867 = vld [vmem:[%s6] sm:$0xff]
    %v868 = vld [vmem:[%s6 + $0x8] sm:$0xff]
    %v869 = vld [vmem:[%s6 + $0x10] sm:$0xff]
    %v870 = vld [vmem:[%s6 + $0x18] sm:$0xff]
    %v871 = vld [vmem:[%s6 + $0x20] sm:$0xff]
    %v872 = vld [vmem:[%s6 + $0x28] sm:$0xff]
    %v873 = vld [vmem:[%s6 + $0x30] sm:$0xff]
    %v874 = vld [vmem:[%s6 + $0x38] sm:$0xff]
    %876 = vset.pattern.permute.xlu0 0
    %877 = vperm.xlu0 %876, %v867
    %v878 = vpop.permute.xlu0 %877
    %881 = vset.pattern.permute.xlu0 0
    %882 = vperm.xlu0 %881, %v868
    %v883 = vpop.permute.xlu0 %882
    %886 = vset.pattern.permute.xlu0 0
    %887 = vperm.xlu0 %886, %v869
    %v888 = vpop.permute.xlu0 %887
    %891 = vset.pattern.permute.xlu0 0
    %892 = vperm.xlu0 %891, %v870
    %v893 = vpop.permute.xlu0 %892
    %896 = vset.pattern.permute.xlu0 0
    %897 = vperm.xlu0 %896, %v871
    %v898 = vpop.permute.xlu0 %897
    %901 = vset.pattern.permute.xlu0 0
    %902 = vperm.xlu0 %901, %v872
    %v903 = vpop.permute.xlu0 %902
    %906 = vset.pattern.permute.xlu0 0
    %907 = vperm.xlu0 %906, %v873
    %v908 = vpop.permute.xlu0 %907
    %911 = vset.pattern.permute.xlu0 0
    %912 = vperm.xlu0 %911, %v874
    %v913 = vpop.permute.xlu0 %912
    %vm915 = vcmask 785408
    %v917 = vsel %vm915, %v859, 0
    %v920 = vsel %vm915, %v860, 0
    %v923 = vsel %vm915, %v861, 0
    %v926 = vsel %vm915, %v862, 0
    %v929 = vsel %vm915, %v863, 0
    %v932 = vsel %vm915, %v864, 0
    %v935 = vsel %vm915, %v865, 0
    %v938 = vsel %vm915, %v866, 0
    %940 = vmatprep.subr.mxu0 %v812
    %941 = vmatpush1.msra.mxu0 %v811
    %942 = vmatprep.subr.mxu0 %v816
    %943 = vmatpush1.msra.mxu0 %v815
    %944 = vmatprep.subr.mxu0 %v820
    %945 = vmatpush1.msra.mxu0 %v819
    %946 = vmatprep.subr.mxu0 %v824
    %947 = vmatpush1.msra.mxu0 %v823
    %948 = vmatprep.subr.mxu0 %v828
    %949 = vmatpush1.msra.mxu0 %v827
    %950 = vmatprep.subr.mxu0 %v832
    %951 = vmatpush1.msra.mxu0 %v831
    %952 = vmatprep.subr.mxu0 %v836
    %953 = vmatpush1.msra.mxu0 %v835
    %954 = vmatprep.subr.mxu0 %v840
    %955 = vmatpush1.msra.mxu0 %v839
    %956 = vmatprep.subr.mxu0 %v844
    %957 = vmatpush1.msra.mxu0 %v843
    %958 = vmatprep.subr.mxu0 %v848
    %959 = vmatpush1.msra.mxu0 %v847
    %960 = vmatprep.subr.mxu0 %v852
    %961 = vmatpush1.msra.mxu0 %v851
    %962 = vmatprep.subr.mxu0 %v856
    %963 = vmatpush1.msra.mxu0 %v855
    %964 = vmatprep.subr.mxu0 0.0
    %965 = vmatpush1.msra.mxu0 0.0
    %966 = vmatprep.subr.mxu0 0.0
    %967 = vmatpush1.msra.mxu0 0.0
    %968 = vmatprep.subr.mxu0 0.0
    %969 = vmatpush1.msra.mxu0 0.0
    %970 = vmatprep.subr.mxu0 0.0
    %971 = vmatpush1.msra.mxu0 0.0
    %972 = vmatprep.subr.mxu0 0.0
    %973 = vmatpush1.msra.mxu0 0.0
    %974 = vmatprep.subr.mxu0 0.0
    %975 = vmatpush1.msra.mxu0 0.0
    %976 = vmatprep.subr.mxu0 0.0
    %977 = vmatpush1.msra.mxu0 0.0
    %978 = vmatprep.subr.mxu0 0.0
    %979 = vmatpush1.msra.mxu0 0.0
    %980 = vmatprep.subr.mxu0 0.0
    %981 = vmatpush1.msra.mxu0 0.0
    %982 = vmatprep.subr.mxu0 0.0
    %983 = vmatpush1.msra.mxu0 0.0
    %984 = vmatprep.subr.mxu0 0.0
    %985 = vmatpush1.msra.mxu0 0.0
    %986 = vmatprep.subr.mxu0 0.0
    %987 = vmatpush1.msra.mxu0 0.0
    %988 = vmatprep.subr.mxu0 0.0
    %989 = vmatpush1.msra.mxu0 0.0
    %990 = vmatprep.subr.mxu0 0.0
    %991 = vmatpush1.msra.mxu0 0.0
    %992 = vmatprep.subr.mxu0 0.0
    %993 = vmatpush1.msra.mxu0 0.0
    %994 = vmatprep.subr.mxu0 0.0
    %995 = vmatpush1.msra.mxu0 0.0
    %996 = vmatprep.subr.mxu0 0.0
    %997 = vmatpush1.msra.mxu0 0.0
    %998 = vmatprep.subr.mxu0 0.0
    %999 = vmatpush1.msra.mxu0 0.0
    %1000 = vmatprep.subr.mxu0 0.0
    %1001 = vmatpush1.msra.mxu0 0.0
    %1002 = vmatprep.subr.mxu0 0.0
    %1003 = vmatpush1.msra.mxu0 0.0
    %1004 = vmatprep.mubr.f32.mxu0 0.0
    %1005 = vmatmul.mubr.f32.gmra.mrb[0].mxu0 %v917
    %v1006 = vpop.f32.mrb[0].mxu0
    %v1007 = vadd.f32 %v878, %v1006
    %v1008 = vpop.f32.mrb[0].mxu0
    %v1009 = vadd.f32 %v878, %v1008
    %1010 = vmatprep.mubr.f32.mxu0 0.0
    %1011 = vmatmul.mubr.f32.gmra.mrb[0].mxu0 %v920
    %v1012 = vpop.f32.mrb[0].mxu0
    %v1013 = vadd.f32 %v883, %v1012
    %v1014 = vpop.f32.mrb[0].mxu0
    %v1015 = vadd.f32 %v883, %v1014
    %1016 = vmatprep.mubr.f32.mxu0 0.0
    %1017 = vmatmul.mubr.f32.gmra.mrb[0].mxu0 %v923
    %v1018 = vpop.f32.mrb[0].mxu0
    %v1019 = vadd.f32 %v888, %v1018
    %v1020 = vpop.f32.mrb[0].mxu0
    %v1021 = vadd.f32 %v888, %v1020
    %1022 = vmatprep.mubr.f32.mxu0 0.0
    %1023 = vmatmul.mubr.f32.gmra.mrb[0].mxu0 %v926
    %v1024 = vpop.f32.mrb[0].mxu0
    %v1025 = vadd.f32 %v893, %v1024
    %v1026 = vpop.f32.mrb[0].mxu0
    %v1027 = vadd.f32 %v893, %v1026
    %1028 = vmatprep.mubr.f32.mxu0 0.0
    %1029 = vmatmul.mubr.f32.gmra.mrb[0].mxu0 %v929
    %v1030 = vpop.f32.mrb[0].mxu0
    %v1031 = vadd.f32 %v898, %v1030
    %v1032 = vpop.f32.mrb[0].mxu0
    %v1033 = vadd.f32 %v898, %v1032
    %1034 = vmatprep.mubr.f32.mxu0 0.0
    %1035 = vmatmul.mubr.f32.gmra.mrb[0].mxu0 %v932
    %v1036 = vpop.f32.mrb[0].mxu0
    %v1037 = vadd.f32 %v903, %v1036
    %v1038 = vpop.f32.mrb[0].mxu0
    %v1039 = vadd.f32 %v903, %v1038
    %1040 = vmatprep.mubr.f32.mxu0 0.0
    %1041 = vmatmul.mubr.f32.gmra.mrb[0].mxu0 %v935
    %v1042 = vpop.f32.mrb[0].mxu0
    %v1043 = vadd.f32 %v908, %v1042
    %v1044 = vpop.f32.mrb[0].mxu0
    %v1045 = vadd.f32 %v908, %v1044
    %1046 = vmatprep.mubr.f32.mxu0 0.0
    %1047 = vmatmul.mubr.f32.gmra.mrb[0].mxu0 %v938
    %v1048 = vpop.f32.mrb[0].mxu0
    %v1049 = vadd.f32 %v913, %v1048
    %v1050 = vpop.f32.mrb[0].mxu0
    %v1051 = vadd.f32 %v913, %v1050
    %1052 = vdwg.mxu0
    %1053 = vmatprep.subr.mxu0 %v814
    %1054 = vmatpush1.msra.mxu0 %v813
    %1055 = vmatprep.subr.mxu0 %v818
    %1056 = vmatpush1.msra.mxu0 %v817
    %1057 = vmatprep.subr.mxu0 %v822
    %1058 = vmatpush1.msra.mxu0 %v821
    %1059 = vmatprep.subr.mxu0 %v826
    %1060 = vmatpush1.msra.mxu0 %v825
    %1061 = vmatprep.subr.mxu0 %v830
    %1062 = vmatpush1.msra.mxu0 %v829
    %1063 = vmatprep.subr.mxu0 %v834
    %1064 = vmatpush1.msra.mxu0 %v833
    %1065 = vmatprep.subr.mxu0 %v838
    %1066 = vmatpush1.msra.mxu0 %v837
    %1067 = vmatprep.subr.mxu0 %v842
    %1068 = vmatpush1.msra.mxu0 %v841
    %1069 = vmatprep.subr.mxu0 %v846
    %1070 = vmatpush1.msra.mxu0 %v845
    %1071 = vmatprep.subr.mxu0 %v850
    %1072 = vmatpush1.msra.mxu0 %v849
    %1073 = vmatprep.subr.mxu0 %v854
    %1074 = vmatpush1.msra.mxu0 %v853
    %1075 = vmatprep.subr.mxu0 %v858
    %1076 = vmatpush1.msra.mxu0 %v857
    %1077 = vmatprep.subr.mxu0 0.0
    %1078 = vmatpush1.msra.mxu0 0.0
    %1079 = vmatprep.subr.mxu0 0.0
    %1080 = vmatpush1.msra.mxu0 0.0
    %1081 = vmatprep.subr.mxu0 0.0
    %1082 = vmatpush1.msra.mxu0 0.0
    %1083 = vmatprep.subr.mxu0 0.0
    %1084 = vmatpush1.msra.mxu0 0.0
    %1085 = vmatprep.subr.mxu0 0.0
    %1086 = vmatpush1.msra.mxu0 0.0
    %1087 = vmatprep.subr.mxu0 0.0
    %1088 = vmatpush1.msra.mxu0 0.0
    %1089 = vmatprep.subr.mxu0 0.0
    %1090 = vmatpush1.msra.mxu0 0.0
    %1091 = vmatprep.subr.mxu0 0.0
    %1092 = vmatpush1.msra.mxu0 0.0
    %1093 = vmatprep.subr.mxu0 0.0
    %1094 = vmatpush1.msra.mxu0 0.0
    %1095 = vmatprep.subr.mxu0 0.0
    %1096 = vmatpush1.msra.mxu0 0.0
    %1097 = vmatprep.subr.mxu0 0.0
    %1098 = vmatpush1.msra.mxu0 0.0
    %1099 = vmatprep.subr.mxu0 0.0
    %1100 = vmatpush1.msra.mxu0 0.0
    %1101 = vmatprep.subr.mxu0 0.0
    %1102 = vmatpush1.msra.mxu0 0.0
    %1103 = vmatprep.subr.mxu0 0.0
    %1104 = vmatpush1.msra.mxu0 0.0
    %1105 = vmatprep.subr.mxu0 0.0
    %1106 = vmatpush1.msra.mxu0 0.0
    %1107 = vmatprep.subr.mxu0 0.0
    %1108 = vmatpush1.msra.mxu0 0.0
    %1109 = vmatprep.subr.mxu0 0.0
    %1110 = vmatpush1.msra.mxu0 0.0
    %1111 = vmatprep.subr.mxu0 0.0
    %1112 = vmatpush1.msra.mxu0 0.0
    %1113 = vmatprep.subr.mxu0 0.0
    %1114 = vmatpush1.msra.mxu0 0.0
    %1115 = vmatprep.subr.mxu0 0.0
    %1116 = vmatpush1.msra.mxu0 0.0
    %1117 = vmatprep.mubr.f32.mxu0 0.0
    %1118 = vmatmul.mubr.f32.gmra.mrb[0].mxu0 %v917
    %v1119 = vpop.f32.mrb[0].mxu0
    %v1120 = vadd.f32 %v878, %v1119
    %v1121 = vpop.f32.mrb[0].mxu0
    %v1122 = vadd.f32 %v878, %v1121
    %1123 = vmatprep.mubr.f32.mxu0 0.0
    %1124 = vmatmul.mubr.f32.gmra.mrb[0].mxu0 %v920
    %v1125 = vpop.f32.mrb[0].mxu0
    %v1126 = vadd.f32 %v883, %v1125
    %v1127 = vpop.f32.mrb[0].mxu0
    %v1128 = vadd.f32 %v883, %v1127
    %1129 = vmatprep.mubr.f32.mxu0 0.0
    %1130 = vmatmul.mubr.f32.gmra.mrb[0].mxu0 %v923
    %v1131 = vpop.f32.mrb[0].mxu0
    %v1132 = vadd.f32 %v888, %v1131
    %v1133 = vpop.f32.mrb[0].mxu0
    %v1134 = vadd.f32 %v888, %v1133
    %1135 = vmatprep.mubr.f32.mxu0 0.0
    %1136 = vmatmul.mubr.f32.gmra.mrb[0].mxu0 %v926
    %v1137 = vpop.f32.mrb[0].mxu0
    %v1138 = vadd.f32 %v893, %v1137
    %v1139 = vpop.f32.mrb[0].mxu0
    %v1140 = vadd.f32 %v893, %v1139
    %1141 = vmatprep.mubr.f32.mxu0 0.0
    %1142 = vmatmul.mubr.f32.gmra.mrb[0].mxu0 %v929
    %v1143 = vpop.f32.mrb[0].mxu0
    %v1144 = vadd.f32 %v898, %v1143
    %v1145 = vpop.f32.mrb[0].mxu0
    %v1146 = vadd.f32 %v898, %v1145
    %1147 = vmatprep.mubr.f32.mxu0 0.0
    %1148 = vmatmul.mubr.f32.gmra.mrb[0].mxu0 %v932
    %v1149 = vpop.f32.mrb[0].mxu0
    %v1150 = vadd.f32 %v903, %v1149
    %v1151 = vpop.f32.mrb[0].mxu0
    %v1152 = vadd.f32 %v903, %v1151
    %1153 = vmatprep.mubr.f32.mxu0 0.0
    %1154 = vmatmul.mubr.f32.gmra.mrb[0].mxu0 %v935
    %v1155 = vpop.f32.mrb[0].mxu0
    %v1156 = vadd.f32 %v908, %v1155
    %v1157 = vpop.f32.mrb[0].mxu0
    %v1158 = vadd.f32 %v908, %v1157
    %1159 = vmatprep.mubr.f32.mxu0 0.0
    %1160 = vmatmul.mubr.f32.gmra.mrb[0].mxu0 %v938
    %v1161 = vpop.f32.mrb[0].mxu0
    %v1162 = vadd.f32 %v913, %v1161
    %v1163 = vpop.f32.mrb[0].mxu0
    %v1164 = vadd.f32 %v913, %v1163
    %1165 = vdwg.mxu0
    %v1166 = vmax.f32 %v1007, 0.0
    %v1167 = vmax.f32 %v1009, 0.0
    %v1168 = vmax.f32 %v1120, 0.0
    %v1169 = vmax.f32 %v1122, 0.0
    %v1170 = vmax.f32 %v1013, 0.0
    %v1171 = vmax.f32 %v1015, 0.0
    %v1172 = vmax.f32 %v1126, 0.0
    %v1173 = vmax.f32 %v1128, 0.0
    %v1174 = vmax.f32 %v1019, 0.0
    %v1175 = vmax.f32 %v1021, 0.0
    %v1176 = vmax.f32 %v1132, 0.0
    %v1177 = vmax.f32 %v1134, 0.0
    %v1178 = vmax.f32 %v1025, 0.0
    %v1179 = vmax.f32 %v1027, 0.0
    %v1180 = vmax.f32 %v1138, 0.0
    %v1181 = vmax.f32 %v1140, 0.0
    %v1182 = vmax.f32 %v1031, 0.0
    %v1183 = vmax.f32 %v1033, 0.0
    %v1184 = vmax.f32 %v1144, 0.0
    %v1185 = vmax.f32 %v1146, 0.0
    %v1186 = vmax.f32 %v1037, 0.0
    %v1187 = vmax.f32 %v1039, 0.0
    %v1188 = vmax.f32 %v1150, 0.0
    %v1189 = vmax.f32 %v1152, 0.0
    %v1190 = vmax.f32 %v1043, 0.0
    %v1191 = vmax.f32 %v1045, 0.0
    %v1192 = vmax.f32 %v1156, 0.0
    %v1193 = vmax.f32 %v1158, 0.0
    %v1194 = vmax.f32 %v1049, 0.0
    %v1195 = vmax.f32 %v1051, 0.0
    %v1196 = vmax.f32 %v1162, 0.0
    %v1197 = vmax.f32 %v1164, 0.0
    %v1198 = vld [vmem:[%s7] sm:$0xff]
    %v1199 = vld [vmem:[%s7 + $0x8] sm:$0xff]
    %v1200 = vld [vmem:[%s7 + $0x10] sm:$0xff]
    %v1201 = vld [vmem:[%s7 + $0x18] sm:$0xff]
    %v1202 = vld [vmem:[%s7 + $0x20] sm:$0xff]
    %v1203 = vld [vmem:[%s7 + $0x28] sm:$0xff]
    %v1204 = vld [vmem:[%s8] sm:$0xff]
    %v1205 = vld [vmem:[%s8 + $0x8] sm:$0xff]
    %v1206 = vld [vmem:[%s8 + $0x10] sm:$0xff]
    %v1207 = vld [vmem:[%s8 + $0x18] sm:$0xff]
    %v1208 = vld [vmem:[%s8 + $0x20] sm:$0xff]
    %v1209 = vld [vmem:[%s8 + $0x28] sm:$0xff]
    %1211 = vset.pattern.permute.xlu0 0
    %1212 = vperm.xlu0 %1211, %v1204
    %v1213 = vpop.permute.xlu0 %1212
    %1216 = vset.pattern.permute.xlu0 0
    %1217 = vperm.xlu0 %1216, %v1205
    %v1218 = vpop.permute.xlu0 %1217
    %1221 = vset.pattern.permute.xlu0 0
    %1222 = vperm.xlu0 %1221, %v1206
    %v1223 = vpop.permute.xlu0 %1222
    %1226 = vset.pattern.permute.xlu0 0
    %1227 = vperm.xlu0 %1226, %v1207
    %v1228 = vpop.permute.xlu0 %1227
    %1231 = vset.pattern.permute.xlu0 0
    %1232 = vperm.xlu0 %1231, %v1208
    %v1233 = vpop.permute.xlu0 %1232
    %1236 = vset.pattern.permute.xlu0 0
    %1237 = vperm.xlu0 %1236, %v1209
    %v1238 = vpop.permute.xlu0 %1237
    %vm1240 = vcmask 523264
    %v1242 = vsel %vm1240, %v1198, 0
    %v1245 = vsel %vm1240, %v1199, 0
    %v1248 = vsel %vm1240, %v1200, 0
    %v1251 = vsel %vm1240, %v1201, 0
    %v1254 = vsel %vm1240, %v1202, 0
    %v1257 = vsel %vm1240, %v1203, 0
    %1259 = vmatprep.subr.mxu0 %v1167
    %1260 = vmatpush1.msra.mxu0 %v1166
    %1261 = vmatprep.subr.mxu0 %v1171
    %1262 = vmatpush1.msra.mxu0 %v1170
    %1263 = vmatprep.subr.mxu0 %v1175
    %1264 = vmatpush1.msra.mxu0 %v1174
    %1265 = vmatprep.subr.mxu0 %v1179
    %1266 = vmatpush1.msra.mxu0 %v1178
    %1267 = vmatprep.subr.mxu0 %v1183
    %1268 = vmatpush1.msra.mxu0 %v1182
    %1269 = vmatprep.subr.mxu0 %v1187
    %1270 = vmatpush1.msra.mxu0 %v1186
    %1271 = vmatprep.subr.mxu0 %v1191
    %1272 = vmatpush1.msra.mxu0 %v1190
    %1273 = vmatprep.subr.mxu0 %v1195
    %1274 = vmatpush1.msra.mxu0 %v1194
    %1275 = vmatprep.subr.mxu0 0.0
    %1276 = vmatpush1.msra.mxu0 0.0
    %1277 = vmatprep.subr.mxu0 0.0
    %1278 = vmatpush1.msra.mxu0 0.0
    %1279 = vmatprep.subr.mxu0 0.0
    %1280 = vmatpush1.msra.mxu0 0.0
    %1281 = vmatprep.subr.mxu0 0.0
    %1282 = vmatpush1.msra.mxu0 0.0
    %1283 = vmatprep.subr.mxu0 0.0
    %1284 = vmatpush1.msra.mxu0 0.0
    %1285 = vmatprep.subr.mxu0 0.0
    %1286 = vmatpush1.msra.mxu0 0.0
    %1287 = vmatprep.subr.mxu0 0.0
    %1288 = vmatpush1.msra.mxu0 0.0
    %1289 = vmatprep.subr.mxu0 0.0
    %1290 = vmatpush1.msra.mxu0 0.0
    %1291 = vmatprep.subr.mxu0 0.0
    %1292 = vmatpush1.msra.mxu0 0.0
    %1293 = vmatprep.subr.mxu0 0.0
    %1294 = vmatpush1.msra.mxu0 0.0
    %1295 = vmatprep.subr.mxu0 0.0
    %1296 = vmatpush1.msra.mxu0 0.0
    %1297 = vmatprep.subr.mxu0 0.0
    %1298 = vmatpush1.msra.mxu0 0.0
    %1299 = vmatprep.subr.mxu0 0.0
    %1300 = vmatpush1.msra.mxu0 0.0
    %1301 = vmatprep.subr.mxu0 0.0
    %1302 = vmatpush1.msra.mxu0 0.0
    %1303 = vmatprep.subr.mxu0 0.0
    %1304 = vmatpush1.msra.mxu0 0.0
    %1305 = vmatprep.subr.mxu0 0.0
    %1306 = vmatpush1.msra.mxu0 0.0
    %1307 = vmatprep.subr.mxu0 0.0
    %1308 = vmatpush1.msra.mxu0 0.0
    %1309 = vmatprep.subr.mxu0 0.0
    %1310 = vmatpush1.msra.mxu0 0.0
    %1311 = vmatprep.subr.mxu0 0.0
    %1312 = vmatpush1.msra.mxu0 0.0
    %1313 = vmatprep.subr.mxu0 0.0
    %1314 = vmatpush1.msra.mxu0 0.0
    %1315 = vmatprep.subr.mxu0 0.0
    %1316 = vmatpush1.msra.mxu0 0.0
    %1317 = vmatprep.subr.mxu0 0.0
    %1318 = vmatpush1.msra.mxu0 0.0
    %1319 = vmatprep.subr.mxu0 0.0
    %1320 = vmatpush1.msra.mxu0 0.0
    %1321 = vmatprep.subr.mxu0 0.0
    %1322 = vmatpush1.msra.mxu0 0.0
    %1323 = vmatprep.mubr.f32.mxu0 0.0
    %1324 = vmatmul.mubr.f32.gmra.mrb[0].mxu0 %v1242
    %v1325 = vpop.f32.mrb[0].mxu0
    %v1326 = vadd.f32 %v1213, %v1325
    %v1327 = vpop.f32.mrb[0].mxu0
    %v1328 = vadd.f32 %v1213, %v1327
    %1329 = vmatprep.mubr.f32.mxu0 0.0
    %1330 = vmatmul.mubr.f32.gmra.mrb[0].mxu0 %v1245
    %v1331 = vpop.f32.mrb[0].mxu0
    %v1332 = vadd.f32 %v1218, %v1331
    %v1333 = vpop.f32.mrb[0].mxu0
    %v1334 = vadd.f32 %v1218, %v1333
    %1335 = vmatprep.mubr.f32.mxu0 0.0
    %1336 = vmatmul.mubr.f32.gmra.mrb[0].mxu0 %v1248
    %v1337 = vpop.f32.mrb[0].mxu0
    %v1338 = vadd.f32 %v1223, %v1337
    %v1339 = vpop.f32.mrb[0].mxu0
    %v1340 = vadd.f32 %v1223, %v1339
    %1341 = vmatprep.mubr.f32.mxu0 0.0
    %1342 = vmatmul.mubr.f32.gmra.mrb[0].mxu0 %v1251
    %v1343 = vpop.f32.mrb[0].mxu0
    %v1344 = vadd.f32 %v1228, %v1343
    %v1345 = vpop.f32.mrb[0].mxu0
    %v1346 = vadd.f32 %v1228, %v1345
    %1347 = vmatprep.mubr.f32.mxu0 0.0
    %1348 = vmatmul.mubr.f32.gmra.mrb[0].mxu0 %v1254
    %v1349 = vpop.f32.mrb[0].mxu0
    %v1350 = vadd.f32 %v1233, %v1349
    %v1351 = vpop.f32.mrb[0].mxu0
    %v1352 = vadd.f32 %v1233, %v1351
    %1353 = vmatprep.mubr.f32.mxu0 0.0
    %1354 = vmatmul.mubr.f32.gmra.mrb[0].mxu0 %v1257
    %v1355 = vpop.f32.mrb[0].mxu0
    %v1356 = vadd.f32 %v1238, %v1355
    %v1357 = vpop.f32.mrb[0].mxu0
    %v1358 = vadd.f32 %v1238, %v1357
    %1359 = vdwg.mxu0
    %1360 = vmatprep.subr.mxu0 %v1169
    %1361 = vmatpush1.msra.mxu0 %v1168
    %1362 = vmatprep.subr.mxu0 %v1173
    %1363 = vmatpush1.msra.mxu0 %v1172
    %1364 = vmatprep.subr.mxu0 %v1177
    %1365 = vmatpush1.msra.mxu0 %v1176
    %1366 = vmatprep.subr.mxu0 %v1181
    %1367 = vmatpush1.msra.mxu0 %v1180
    %1368 = vmatprep.subr.mxu0 %v1185
    %1369 = vmatpush1.msra.mxu0 %v1184
    %1370 = vmatprep.subr.mxu0 %v1189
    %1371 = vmatpush1.msra.mxu0 %v1188
    %1372 = vmatprep.subr.mxu0 %v1193
    %1373 = vmatpush1.msra.mxu0 %v1192
    %1374 = vmatprep.subr.mxu0 %v1197
    %1375 = vmatpush1.msra.mxu0 %v1196
    %1376 = vmatprep.subr.mxu0 0.0
    %1377 = vmatpush1.msra.mxu0 0.0
    %1378 = vmatprep.subr.mxu0 0.0
    %1379 = vmatpush1.msra.mxu0 0.0
    %1380 = vmatprep.subr.mxu0 0.0
    %1381 = vmatpush1.msra.mxu0 0.0
    %1382 = vmatprep.subr.mxu0 0.0
    %1383 = vmatpush1.msra.mxu0 0.0
    %1384 = vmatprep.subr.mxu0 0.0
    %1385 = vmatpush1.msra.mxu0 0.0
    %1386 = vmatprep.subr.mxu0 0.0
    %1387 = vmatpush1.msra.mxu0 0.0
    %1388 = vmatprep.subr.mxu0 0.0
    %1389 = vmatpush1.msra.mxu0 0.0
    %1390 = vmatprep.subr.mxu0 0.0
    %1391 = vmatpush1.msra.mxu0 0.0
    %1392 = vmatprep.subr.mxu0 0.0
    %1393 = vmatpush1.msra.mxu0 0.0
    %1394 = vmatprep.subr.mxu0 0.0
    %1395 = vmatpush1.msra.mxu0 0.0
    %1396 = vmatprep.subr.mxu0 0.0
    %1397 = vmatpush1.msra.mxu0 0.0
    %1398 = vmatprep.subr.mxu0 0.0
    %1399 = vmatpush1.msra.mxu0 0.0
    %1400 = vmatprep.subr.mxu0 0.0
    %1401 = vmatpush1.msra.mxu0 0.0
    %1402 = vmatprep.subr.mxu0 0.0
    %1403 = vmatpush1.msra.mxu0 0.0
    %1404 = vmatprep.subr.mxu0 0.0
    %1405 = vmatpush1.msra.mxu0 0.0
    %1406 = vmatprep.subr.mxu0 0.0
    %1407 = vmatpush1.msra.mxu0 0.0
    %1408 = vmatprep.subr.mxu0 0.0
    %1409 = vmatpush1.msra.mxu0 0.0
    %1410 = vmatprep.subr.mxu0 0.0
    %1411 = vmatpush1.msra.mxu0 0.0
    %1412 = vmatprep.subr.mxu0 0.0
    %1413 = vmatpush1.msra.mxu0 0.0
    %1414 = vmatprep.subr.mxu0 0.0
    %1415 = vmatpush1.msra.mxu0 0.0
    %1416 = vmatprep.subr.mxu0 0.0
    %1417 = vmatpush1.msra.mxu0 0.0
    %1418 = vmatprep.subr.mxu0 0.0
    %1419 = vmatpush1.msra.mxu0 0.0
    %1420 = vmatprep.subr.mxu0 0.0
    %1421 = vmatpush1.msra.mxu0 0.0
    %1422 = vmatprep.subr.mxu0 0.0
    %1423 = vmatpush1.msra.mxu0 0.0
    %1424 = vmatprep.mubr.f32.mxu0 0.0
    %1425 = vmatmul.mubr.f32.gmra.mrb[0].mxu0 %v1242
    %v1426 = vpop.f32.mrb[0].mxu0
    %v1427 = vadd.f32 %v1213, %v1426
    %v1428 = vpop.f32.mrb[0].mxu0
    %v1429 = vadd.f32 %v1213, %v1428
    %1430 = vmatprep.mubr.f32.mxu0 0.0
    %1431 = vmatmul.mubr.f32.gmra.mrb[0].mxu0 %v1245
    %v1432 = vpop.f32.mrb[0].mxu0
    %v1433 = vadd.f32 %v1218, %v1432
    %v1434 = vpop.f32.mrb[0].mxu0
    %v1435 = vadd.f32 %v1218, %v1434
    %1436 = vmatprep.mubr.f32.mxu0 0.0
    %1437 = vmatmul.mubr.f32.gmra.mrb[0].mxu0 %v1248
    %v1438 = vpop.f32.mrb[0].mxu0
    %v1439 = vadd.f32 %v1223, %v1438
    %v1440 = vpop.f32.mrb[0].mxu0
    %v1441 = vadd.f32 %v1223, %v1440
    %1442 = vmatprep.mubr.f32.mxu0 0.0
    %1443 = vmatmul.mubr.f32.gmra.mrb[0].mxu0 %v1251
    %v1444 = vpop.f32.mrb[0].mxu0
    %v1445 = vadd.f32 %v1228, %v1444
    %v1446 = vpop.f32.mrb[0].mxu0
    %v1447 = vadd.f32 %v1228, %v1446
    %1448 = vmatprep.mubr.f32.mxu0 0.0
    %1449 = vmatmul.mubr.f32.gmra.mrb[0].mxu0 %v1254
    %v1450 = vpop.f32.mrb[0].mxu0
    %v1451 = vadd.f32 %v1233, %v1450
    %v1452 = vpop.f32.mrb[0].mxu0
    %v1453 = vadd.f32 %v1233, %v1452
    %1454 = vmatprep.mubr.f32.mxu0 0.0
    %1455 = vmatmul.mubr.f32.gmra.mrb[0].mxu0 %v1257
    %v1456 = vpop.f32.mrb[0].mxu0
    %v1457 = vadd.f32 %v1238, %v1456
    %v1458 = vpop.f32.mrb[0].mxu0
    %v1459 = vadd.f32 %v1238, %v1458
    %1460 = vdwg.mxu0
    %v1461 = vmax.f32 %v1326, 0.0
    %v1462 = vmax.f32 %v1328, 0.0
    %v1463 = vmax.f32 %v1427, 0.0
    %v1464 = vmax.f32 %v1429, 0.0
    %v1465 = vmax.f32 %v1332, 0.0
    %v1466 = vmax.f32 %v1334, 0.0
    %v1467 = vmax.f32 %v1433, 0.0
    %v1468 = vmax.f32 %v1435, 0.0
    %v1469 = vmax.f32 %v1338, 0.0
    %v1470 = vmax.f32 %v1340, 0.0
    %v1471 = vmax.f32 %v1439, 0.0
    %v1472 = vmax.f32 %v1441, 0.0
    %v1473 = vmax.f32 %v1344, 0.0
    %v1474 = vmax.f32 %v1346, 0.0
    %v1475 = vmax.f32 %v1445, 0.0
    %v1476 = vmax.f32 %v1447, 0.0
    %v1477 = vmax.f32 %v1350, 0.0
    %v1478 = vmax.f32 %v1352, 0.0
    %v1479 = vmax.f32 %v1451, 0.0
    %v1480 = vmax.f32 %v1453, 0.0
    %v1481 = vmax.f32 %v1356, 0.0
    %v1482 = vmax.f32 %v1358, 0.0
    %v1483 = vmax.f32 %v1457, 0.0
    %v1484 = vmax.f32 %v1459, 0.0
    %v1485 = vld [vmem:[%s9] sm:$0xff]
    %v1486 = vld [vmem:[%s9 + $0x8] sm:$0xff]
    %v1487 = vld [vmem:[%s9 + $0x10] sm:$0xff]
    %v1488 = vld [vmem:[%s9 + $0x18] sm:$0xff]
    %v1489 = vld [vmem:[%s10] sm:$0xff]
    %v1490 = vld [vmem:[%s10 + $0x8] sm:$0xff]
    %v1491 = vld [vmem:[%s10 + $0x10] sm:$0xff]
    %v1492 = vld [vmem:[%s10 + $0x18] sm:$0xff]
    %1494 = vset.pattern.permute.xlu0 0
    %1495 = vperm.xlu0 %1494, %v1489
    %v1496 = vpop.permute.xlu0 %1495
    %1499 = vset.pattern.permute.xlu0 0
    %1500 = vperm.xlu0 %1499, %v1490
    %v1501 = vpop.permute.xlu0 %1500
    %1504 = vset.pattern.permute.xlu0 0
    %1505 = vperm.xlu0 %1504, %v1491
    %v1506 = vpop.permute.xlu0 %1505
    %1509 = vset.pattern.permute.xlu0 0
    %1510 = vperm.xlu0 %1509, %v1492
    %v1511 = vpop.permute.xlu0 %1510
    %vm1513 = vcmask 392192
    %v1515 = vsel %vm1513, %v1485, 0
    %v1518 = vsel %vm1513, %v1486, 0
    %v1521 = vsel %vm1513, %v1487, 0
    %v1524 = vsel %vm1513, %v1488, 0
    %1526 = vmatprep.subr.mxu0 %v1462
    %1527 = vmatpush1.msra.mxu0 %v1461
    %1528 = vmatprep.subr.mxu0 %v1466
    %1529 = vmatpush1.msra.mxu0 %v1465
    %1530 = vmatprep.subr.mxu0 %v1470
    %1531 = vmatpush1.msra.mxu0 %v1469
    %1532 = vmatprep.subr.mxu0 %v1474
    %1533 = vmatpush1.msra.mxu0 %v1473
    %1534 = vmatprep.subr.mxu0 %v1478
    %1535 = vmatpush1.msra.mxu0 %v1477
    %1536 = vmatprep.subr.mxu0 %v1482
    %1537 = vmatpush1.msra.mxu0 %v1481
    %1538 = vmatprep.subr.mxu0 0.0
    %1539 = vmatpush1.msra.mxu0 0.0
    %1540 = vmatprep.subr.mxu0 0.0
    %1541 = vmatpush1.msra.mxu0 0.0
    %1542 = vmatprep.subr.mxu0 0.0
    %1543 = vmatpush1.msra.mxu0 0.0
    %1544 = vmatprep.subr.mxu0 0.0
    %1545 = vmatpush1.msra.mxu0 0.0
    %1546 = vmatprep.subr.mxu0 0.0
    %1547 = vmatpush1.msra.mxu0 0.0
    %1548 = vmatprep.subr.mxu0 0.0
    %1549 = vmatpush1.msra.mxu0 0.0
    %1550 = vmatprep.subr.mxu0 0.0
    %1551 = vmatpush1.msra.mxu0 0.0
    %1552 = vmatprep.subr.mxu0 0.0
    %1553 = vmatpush1.msra.mxu0 0.0
    %1554 = vmatprep.subr.mxu0 0.0
    %1555 = vmatpush1.msra.mxu0 0.0
    %1556 = vmatprep.subr.mxu0 0.0
    %1557 = vmatpush1.msra.mxu0 0.0
    %1558 = vmatprep.subr.mxu0 0.0
    %1559 = vmatpush1.msra.mxu0 0.0
    %1560 = vmatprep.subr.mxu0 0.0
    %1561 = vmatpush1.msra.mxu0 0.0
    %1562 = vmatprep.subr.mxu0 0.0
    %1563 = vmatpush1.msra.mxu0 0.0
    %1564 = vmatprep.subr.mxu0 0.0
    %1565 = vmatpush1.msra.mxu0 0.0
    %1566 = vmatprep.subr.mxu0 0.0
    %1567 = vmatpush1.msra.mxu0 0.0
    %1568 = vmatprep.subr.mxu0 0.0
    %1569 = vmatpush1.msra.mxu0 0.0
    %1570 = vmatprep.subr.mxu0 0.0
    %1571 = vmatpush1.msra.mxu0 0.0
    %1572 = vmatprep.subr.mxu0 0.0
    %1573 = vmatpush1.msra.mxu0 0.0
    %1574 = vmatprep.subr.mxu0 0.0
    %1575 = vmatpush1.msra.mxu0 0.0
    %1576 = vmatprep.subr.mxu0 0.0
    %1577 = vmatpush1.msra.mxu0 0.0
    %1578 = vmatprep.subr.mxu0 0.0
    %1579 = vmatpush1.msra.mxu0 0.0
    %1580 = vmatprep.subr.mxu0 0.0
    %1581 = vmatpush1.msra.mxu0 0.0
    %1582 = vmatprep.subr.mxu0 0.0
    %1583 = vmatpush1.msra.mxu0 0.0
    %1584 = vmatprep.subr.mxu0 0.0
    %1585 = vmatpush1.msra.mxu0 0.0
    %1586 = vmatprep.subr.mxu0 0.0
    %1587 = vmatpush1.msra.mxu0 0.0
    %1588 = vmatprep.subr.mxu0 0.0
    %1589 = vmatpush1.msra.mxu0 0.0
    %1590 = vmatprep.mubr.f32.mxu0 0.0
    %1591 = vmatmul.mubr.f32.gmra.mrb[0].mxu0 %v1515
    %v1592 = vpop.f32.mrb[0].mxu0
    %v1593 = vadd.f32 %v1496, %v1592
    %v1594 = vpop.f32.mrb[0].mxu0
    %v1595 = vadd.f32 %v1496, %v1594
    %1596 = vmatprep.mubr.f32.mxu0 0.0
    %1597 = vmatmul.mubr.f32.gmra.mrb[0].mxu0 %v1518
    %v1598 = vpop.f32.mrb[0].mxu0
    %v1599 = vadd.f32 %v1501, %v1598
    %v1600 = vpop.f32.mrb[0].mxu0
    %v1601 = vadd.f32 %v1501, %v1600
    %1602 = vmatprep.mubr.f32.mxu0 0.0
    %1603 = vmatmul.mubr.f32.gmra.mrb[0].mxu0 %v1521
    %v1604 = vpop.f32.mrb[0].mxu0
    %v1605 = vadd.f32 %v1506, %v1604
    %v1606 = vpop.f32.mrb[0].mxu0
    %v1607 = vadd.f32 %v1506, %v1606
    %1608 = vmatprep.mubr.f32.mxu0 0.0
    %1609 = vmatmul.mubr.f32.gmra.mrb[0].mxu0 %v1524
    %v1610 = vpop.f32.mrb[0].mxu0
    %v1611 = vadd.f32 %v1511, %v1610
    %v1612 = vpop.f32.mrb[0].mxu0
    %v1613 = vadd.f32 %v1511, %v1612
    %1614 = vdwg.mxu0
    %1615 = vmatprep.subr.mxu0 %v1464
    %1616 = vmatpush1.msra.mxu0 %v1463
    %1617 = vmatprep.subr.mxu0 %v1468
    %1618 = vmatpush1.msra.mxu0 %v1467
    %1619 = vmatprep.subr.mxu0 %v1472
    %1620 = vmatpush1.msra.mxu0 %v1471
    %1621 = vmatprep.subr.mxu0 %v1476
    %1622 = vmatpush1.msra.mxu0 %v1475
    %1623 = vmatprep.subr.mxu0 %v1480
    %1624 = vmatpush1.msra.mxu0 %v1479
    %1625 = vmatprep.subr.mxu0 %v1484
    %1626 = vmatpush1.msra.mxu0 %v1483
    %1627 = vmatprep.subr.mxu0 0.0
    %1628 = vmatpush1.msra.mxu0 0.0
    %1629 = vmatprep.subr.mxu0 0.0
    %1630 = vmatpush1.msra.mxu0 0.0
    %1631 = vmatprep.subr.mxu0 0.0
    %1632 = vmatpush1.msra.mxu0 0.0
    %1633 = vmatprep.subr.mxu0 0.0
    %1634 = vmatpush1.msra.mxu0 0.0
    %1635 = vmatprep.subr.mxu0 0.0
    %1636 = vmatpush1.msra.mxu0 0.0
    %1637 = vmatprep.subr.mxu0 0.0
    %1638 = vmatpush1.msra.mxu0 0.0
    %1639 = vmatprep.subr.mxu0 0.0
    %1640 = vmatpush1.msra.mxu0 0.0
    %1641 = vmatprep.subr.mxu0 0.0
    %1642 = vmatpush1.msra.mxu0 0.0
    %1643 = vmatprep.subr.mxu0 0.0
    %1644 = vmatpush1.msra.mxu0 0.0
    %1645 = vmatprep.subr.mxu0 0.0
    %1646 = vmatpush1.msra.mxu0 0.0
    %1647 = vmatprep.subr.mxu0 0.0
    %1648 = vmatpush1.msra.mxu0 0.0
    %1649 = vmatprep.subr.mxu0 0.0
    %1650 = vmatpush1.msra.mxu0 0.0
    %1651 = vmatprep.subr.mxu0 0.0
    %1652 = vmatpush1.msra.mxu0 0.0
    %1653 = vmatprep.subr.mxu0 0.0
    %1654 = vmatpush1.msra.mxu0 0.0
    %1655 = vmatprep.subr.mxu0 0.0
    %1656 = vmatpush1.msra.mxu0 0.0
    %1657 = vmatprep.subr.mxu0 0.0
    %1658 = vmatpush1.msra.mxu0 0.0
    %1659 = vmatprep.subr.mxu0 0.0
    %1660 = vmatpush1.msra.mxu0 0.0
    %1661 = vmatprep.subr.mxu0 0.0
    %1662 = vmatpush1.msra.mxu0 0.0
    %1663 = vmatprep.subr.mxu0 0.0
    %1664 = vmatpush1.msra.mxu0 0.0
    %1665 = vmatprep.subr.mxu0 0.0
    %1666 = vmatpush1.msra.mxu0 0.0
    %1667 = vmatprep.subr.mxu0 0.0
    %1668 = vmatpush1.msra.mxu0 0.0
    %1669 = vmatprep.subr.mxu0 0.0
    %1670 = vmatpush1.msra.mxu0 0.0
    %1671 = vmatprep.subr.mxu0 0.0
    %1672 = vmatpush1.msra.mxu0 0.0
    %1673 = vmatprep.subr.mxu0 0.0
    %1674 = vmatpush1.msra.mxu0 0.0
    %1675 = vmatprep.subr.mxu0 0.0
    %1676 = vmatpush1.msra.mxu0 0.0
    %1677 = vmatprep.subr.mxu0 0.0
    %1678 = vmatpush1.msra.mxu0 0.0
    %1679 = vmatprep.mubr.f32.mxu0 0.0
    %1680 = vmatmul.mubr.f32.gmra.mrb[0].mxu0 %v1515
    %v1681 = vpop.f32.mrb[0].mxu0
    %v1682 = vadd.f32 %v1496, %v1681
    %v1683 = vpop.f32.mrb[0].mxu0
    %v1684 = vadd.f32 %v1496, %v1683
    %1685 = vmatprep.mubr.f32.mxu0 0.0
    %1686 = vmatmul.mubr.f32.gmra.mrb[0].mxu0 %v1518
    %v1687 = vpop.f32.mrb[0].mxu0
    %v1688 = vadd.f32 %v1501, %v1687
    %v1689 = vpop.f32.mrb[0].mxu0
    %v1690 = vadd.f32 %v1501, %v1689
    %1691 = vmatprep.mubr.f32.mxu0 0.0
    %1692 = vmatmul.mubr.f32.gmra.mrb[0].mxu0 %v1521
    %v1693 = vpop.f32.mrb[0].mxu0
    %v1694 = vadd.f32 %v1506, %v1693
    %v1695 = vpop.f32.mrb[0].mxu0
    %v1696 = vadd.f32 %v1506, %v1695
    %1697 = vmatprep.mubr.f32.mxu0 0.0
    %1698 = vmatmul.mubr.f32.gmra.mrb[0].mxu0 %v1524
    %v1699 = vpop.f32.mrb[0].mxu0
    %v1700 = vadd.f32 %v1511, %v1699
    %v1701 = vpop.f32.mrb[0].mxu0
    %v1702 = vadd.f32 %v1511, %v1701
    %1703 = vdwg.mxu0
    %v1704 = vmax.f32 %v1593, 0.0
    %v1705 = vmax.f32 %v1595, 0.0
    %v1706 = vmax.f32 %v1682, 0.0
    %v1707 = vmax.f32 %v1684, 0.0
    %v1708 = vmax.f32 %v1599, 0.0
    %v1709 = vmax.f32 %v1601, 0.0
    %v1710 = vmax.f32 %v1688, 0.0
    %v1711 = vmax.f32 %v1690, 0.0
    %v1712 = vmax.f32 %v1605, 0.0
    %v1713 = vmax.f32 %v1607, 0.0
    %v1714 = vmax.f32 %v1694, 0.0
    %v1715 = vmax.f32 %v1696, 0.0
    %v1716 = vmax.f32 %v1611, 0.0
    %v1717 = vmax.f32 %v1613, 0.0
    %v1718 = vmax.f32 %v1700, 0.0
    %v1719 = vmax.f32 %v1702, 0.0
    %v1720 = vld [vmem:[%s11] sm:$0xff]
    %v1721 = vld [vmem:[%s11 + $0x8] sm:$0xff]
    %v1722 = vld [vmem:[%s11 + $0x10] sm:$0xff]
    %v1723 = vld [vmem:[%s11 + $0x18] sm:$0xff]
    %v1724 = vld [vmem:[#allocation2] sm:$0x1]
    %1726 = vset.pattern.permute.xlu0 0
    %1727 = vperm.xlu0 %1726, %v1720
    %v1728 = vpop.permute.xlu0 %1727
    %1731 = vset.pattern.permute.xlu0 0
    %1732 = vperm.xlu0 %1731, %v1721
    %v1733 = vpop.permute.xlu0 %1732
    %1736 = vset.pattern.permute.xlu0 0
    %1737 = vperm.xlu0 %1736, %v1722
    %v1738 = vpop.permute.xlu0 %1737
    %1741 = vset.pattern.permute.xlu0 0
    %1742 = vperm.xlu0 %1741, %v1723
    %v1743 = vpop.permute.xlu0 %1742
    %v1745 = vmul.f32 %v1728, %v1704
    %v1746 = vmul.f32 %v1728, %v1705
    %v1747 = vmul.f32 %v1728, %v1706
    %v1748 = vmul.f32 %v1728, %v1707
    %v1749 = vmul.f32 %v1733, %v1708
    %v1750 = vmul.f32 %v1733, %v1709
    %v1751 = vmul.f32 %v1733, %v1710
    %v1752 = vmul.f32 %v1733, %v1711
    %v1753 = vmul.f32 %v1738, %v1712
    %v1754 = vmul.f32 %v1738, %v1713
    %v1755 = vmul.f32 %v1738, %v1714
    %v1756 = vmul.f32 %v1738, %v1715
    %v1757 = vmul.f32 %v1743, %v1716
    %v1758 = vmul.f32 %v1743, %v1717
    %v1759 = vmul.f32 %v1743, %v1718
    %v1760 = vmul.f32 %v1743, %v1719
    %v1761 = vadd.f32 %v1745, %v1749
    %v1762 = vadd.f32 %v1761, %v1753
    %v1763 = vadd.f32 %v1762, %v1757
    %v1764 = vrot.slane %v1763, 4
    %v1765 = vadd.f32 %v1763, %v1764
    %v1766 = vrot.slane %v1765, 2
    %v1767 = vadd.f32 %v1765, %v1766
    %v1768 = vrot.slane %v1767, 1
    %v1769 = vadd.f32 %v1767, %v1768
    %v1770 = vadd.f32 %v1746, %v1750
    %v1771 = vadd.f32 %v1770, %v1754
    %v1772 = vadd.f32 %v1771, %v1758
    %v1773 = vrot.slane %v1772, 4
    %v1774 = vadd.f32 %v1772, %v1773
    %v1775 = vrot.slane %v1774, 2
    %v1776 = vadd.f32 %v1774, %v1775
    %v1777 = vrot.slane %v1776, 1
    %v1778 = vadd.f32 %v1776, %v1777
    %v1779 = vadd.f32 %v1747, %v1751
    %v1780 = vadd.f32 %v1779, %v1755
    %v1781 = vadd.f32 %v1780, %v1759
    %v1782 = vrot.slane %v1781, 4
    %v1783 = vadd.f32 %v1781, %v1782
    %v1784 = vrot.slane %v1783, 2
    %v1785 = vadd.f32 %v1783, %v1784
    %v1786 = vrot.slane %v1785, 1
    %v1787 = vadd.f32 %v1785, %v1786
    %v1788 = vadd.f32 %v1748, %v1752
    %v1789 = vadd.f32 %v1788, %v1756
    %v1790 = vadd.f32 %v1789, %v1760
    %v1791 = vrot.slane %v1790, 4
    %v1792 = vadd.f32 %v1790, %v1791
    %v1793 = vrot.slane %v1792, 2
    %v1794 = vadd.f32 %v1792, %v1793
    %v1795 = vrot.slane %v1794, 1
    %v1796 = vadd.f32 %v1794, %v1795
    %1798 = vset.pattern.permute.xlu0 0
    %1799 = vperm.xlu0 %1798, %v1724
    %v1800 = vpop.permute.xlu0 %1799
    %v1802 = vlaneseq
    %v1803 = vshrl.u32 %v1802, 7
    %v1804 = vsub.s32 0, %v1803
    %v1805 = vrot.slane %v1800, %v1804
    %v1806 = vadd.f32 %v1769, %v1805
    %v1807 = vadd.f32 %v1778, %v1805
    %v1808 = vadd.f32 %v1787, %v1805
    %v1809 = vadd.f32 %v1796, %v1805
    %v1814 = vcombine.low %v1806, %v1807
    %v1815 = vcombine.low %v1808, %v1809
    %v1817 = vunpack.c.l.s4 1966171168
    %v1818 = vunpack.c.0.s8 %v1817
    %v1819 = vlaneseq
    %v1820 = vshrl.u32 %v1819, 7
    %v1821 = vsub.s32 %v1818, %v1820
    %v1822 = vrot.slane %v1814, %v1821
    %v1824 = vunpack.c.l.s4 1966171168
    %v1825 = vunpack.c.0.s8 %v1824
    %v1826 = vlaneseq
    %v1827 = vshrl.u32 %v1826, 7
    %v1828 = vsub.s32 %v1825, %v1827
    %v1829 = vrot.slane %v1815, %v1828
    %v1830 = vcombine.low %v1822, %v1829
    %v1832 = vunpack.c.l.s4 1966171168
    %v1833 = vunpack.c.0.s8 %v1832
    %v1834 = vlaneseq
    %v1835 = vshrl.u32 %v1834, 7
    %v1836 = vsub.s32 %v1833, %v1835
    %v1837 = vrot.slane %v1830, %v1836
    %v1839 = vlaneseq
    %vm1840 = vcmp.ge.s32.totalorder %v1839, 0
    %vm1841 = vcmp.lt.s32.totalorder %v1839, 512
    %vm1842 = vmand %vm1840, %vm1841
    %1843 = vst.msk [vmem:[#allocation3] sm:$0xf] %vm1842, %v1837
    // Predicated region
    $region54: #{mlp_forward.1} parent=1 // pred_check
      _
    $region55: #{mlp_forward.1} parent=1 // pred_check_branch
      %1845 = sbr.rel (0) target = $region57
    $region56: #{mlp_forward.1} parent=1 // pred_region
      %s1847 = ssub.s32 64, 64
      %1848 = vsyncadd [#allocation4], %s1847
      %s1850 = sshll.u32 [#allocation3], 4
      %s1851 = int_to_ptr.vmem [resolvable:$true] %s1850
      %1853 = dma.vmem_to_hbm [thread:$0]  %s1851, 64, %s13, [#allocation4]
    $region57: #{mlp_forward.1} parent=1 // pred_fallthru
      _
    // Predicated region
    $region58: #{mlp_forward.1} parent=1 // pred_check
      _
    $region59: #{mlp_forward.1} parent=1 // pred_check_branch
      %1855 = sbr.rel (0) target = $region61
    $region60: #{mlp_forward.1} parent=1 // pred_region
      %1856 = dma.done [#allocation4], 64
    $region61: #{mlp_forward.1} parent=1 // pred_fallthru
      _
    %1857 = vsyncpa [#allocation4], 1

</llo_original>
